<compile_context>
chip_gen: v7x
topology: tpu7x:2x2x1
jax: 0.10.0
libtpu: 0.0.40
codegen_flags: <defaults>
</compile_context>

<pallas_src>
import numpy as np
import jax
import jax.numpy as jnp
from jax.experimental import pallas as pl
from jax.experimental.pallas import tpu as pltpu


# ----------------------- fused per-layer kernel -----------------------

def _make_layer_kernel(C, H, W, body_acts):
    """One v3Baiscblock layer, fully fused.

    Layout: channels on sublanes, flattened spatial H*W on lanes.
      x_ref:       (1, C, H*W)    layer input
      res_ref:     (1, 3, H*W)    network-level residual (original image)
      bdw_ref:     (nb, C, 9)     body depthwise taps, tap k = kh*3 + kw
      bpw_ref:     (nb, C, C)     body 1x1 weights [cout, cin]
      h0dw_r_ref:  (3, 9)         head block 0 dw taps for the residual channels
      h0dw_b_ref:  (C, 9)         head block 0 dw taps for the body channels
      h0pw_r_ref:  (C+3, 3)       head block 0 1x1 columns for residual channels
      h0pw_b_ref:  (C+3, C)       head block 0 1x1 columns for body channels
      h1dw_ref:    (C+3, 9)       head block 1 dw taps
      h1pw_ref:    (C+3, C+3)     head block 1 1x1 weight
      mask_ref:    (4, H*W)       edge masks: [w!=0, w!=W-1, h!=0, h!=H-1]
      o_ref:       (1, C+3, H*W)  layer output
    (ShuffleBlock + cat ordering are already folded into the head-0 weights.)
    """
    HW = H * W
    nb = len(body_acts)
    # Roll amounts (all positive; cyclic over the full H*W axis).
    S_L, S_R = 1, HW - 1      # source pixel (h, w-1) / (h, w+1)
    S_T, S_B = W, HW - W      # source pixel (h-1, w) / (h+1, w)

    def kernel(x_ref, res_ref, bdw_ref, bpw_ref,
               h0dw_r_ref, h0dw_b_ref, h0pw_r_ref, h0pw_b_ref,
               h1dw_ref, h1pw_ref, mask_ref, o_ref):
        m_l = mask_ref[0:1, :]   # 0.0 where w == 0
        m_r = mask_ref[1:2, :]   # 0.0 where w == W-1
        m_t = mask_ref[2:3, :]   # 0.0 where h == 0
        m_b = mask_ref[3:4, :]   # 0.0 where h == H-1

        def dwise(cur, taps):
            # Depthwise 3x3 (stride 1, pad 1, groups=C) over the flattened
            # spatial axis: XLU rolls + edge masks.  Column masks are applied
            # once to the shifted columns; row masks once to the rolled
            # kh=0 / kh=2 partial sums (they also kill the cyclic roll wrap).
            xl = pltpu.roll(cur, S_L, axis=1) * m_l
            xr = pltpu.roll(cur, S_R, axis=1) * m_r
            top = xl * taps[:, 0:1] + cur * taps[:, 1:2] + xr * taps[:, 2:3]
            mid = xl * taps[:, 3:4] + cur * taps[:, 4:5] + xr * taps[:, 5:6]
            bot = xl * taps[:, 6:7] + cur * taps[:, 7:8] + xr * taps[:, 8:9]
            return (mid
                    + m_t * pltpu.roll(top, S_T, axis=1)
                    + m_b * pltpu.roll(bot, S_B, axis=1))

        def gelu(v):
            # tanh GELU -> EUP slot (review item); drift vs. erf stays well
            # inside the 1e-2 relative test tolerance.
            return jax.nn.gelu(v, approximate=True)

        # ---------------- body: nb x basicBlock(C, C) ----------------
        cur = x_ref[0].astype(jnp.float32)
        for b in range(nb):
            a = gelu(dwise(cur, bdw_ref[b].astype(jnp.float32)))
            cur = jnp.dot(bpw_ref[b].astype(jnp.float32), a,
                          preferred_element_type=jnp.float32)
            if body_acts[b]:
                cur = gelu(cur)

        # ----- cat([residual, body]) + ShuffleBlock + head block 0 -----
        # The shuffle permutation is folded into head-0 weights; the cat is
        # folded by splitting head-0's depthwise/1x1 weights over the two
        # channel groups (depthwise is per-channel; 1x1 is a column split),
        # so no channel-offset stores or concatenates are needed in-kernel.
        res = res_ref[0].astype(jnp.float32)
        g_r = gelu(dwise(res, h0dw_r_ref[...].astype(jnp.float32)))
        g_b = gelu(dwise(cur, h0dw_b_ref[...].astype(jnp.float32)))
        cur = (jnp.dot(h0pw_r_ref[...].astype(jnp.float32), g_r,
                       preferred_element_type=jnp.float32)
               + jnp.dot(h0pw_b_ref[...].astype(jnp.float32), g_b,
                         preferred_element_type=jnp.float32))
        cur = gelu(cur)

        # ---------------- head block 1 ----------------
        a = gelu(dwise(cur, h1dw_ref[...].astype(jnp.float32)))
        cur = jnp.dot(h1pw_ref[...].astype(jnp.float32), a,
                      preferred_element_type=jnp.float32)
        cur = gelu(cur)

        o_ref[0] = cur.astype(o_ref.dtype)

    return kernel


_CALL_CACHE = {}


def _layer_call(N, C, H, W, body_acts, dtype):
    key = (N, C, H, W, tuple(body_acts), jnp.dtype(dtype).name)
    if key not in _CALL_CACHE:
        HW = H * W
        Cc = C + 3
        nb = len(body_acts)
        grid_spec = pltpu.PrefetchScalarGridSpec(
            num_scalar_prefetch=0,
            grid=(N,),
            in_specs=[
                pl.BlockSpec((1, C, HW), lambda n: (n, 0, 0)),   # x
                pl.BlockSpec((1, 3, HW), lambda n: (n, 0, 0)),   # residual
                pl.BlockSpec((nb, C, 9), lambda n: (0, 0, 0)),   # body dw taps
                pl.BlockSpec((nb, C, C), lambda n: (0, 0, 0)),   # body 1x1
                pl.BlockSpec((3, 9), lambda n: (0, 0)),          # head0 dw (res)
                pl.BlockSpec((C, 9), lambda n: (0, 0)),          # head0 dw (body)
                pl.BlockSpec((Cc, 3), lambda n: (0, 0)),         # head0 1x1 (res)
                pl.BlockSpec((Cc, C), lambda n: (0, 0)),         # head0 1x1 (body)
                pl.BlockSpec((Cc, 9), lambda n: (0, 0)),         # head1 dw taps
                pl.BlockSpec((Cc, Cc), lambda n: (0, 0)),        # head1 1x1
                pl.BlockSpec((4, HW), lambda n: (0, 0)),         # edge masks
            ],
            out_specs=pl.BlockSpec((1, Cc, HW), lambda n: (n, 0, 0)),
        )
        _CALL_CACHE[key] = pl.pallas_call(
            _make_layer_kernel(C, H, W, tuple(body_acts)),
            out_shape=jax.ShapeDtypeStruct((N, Cc, HW), dtype),
            grid_spec=grid_spec,
            compiler_params=pltpu.CompilerParams(
                dimension_semantics=("parallel",)),  # one image per TC on v7x
        )
    return _CALL_CACHE[key]


def layer_pallas(x_flat, res_flat, body, head, H, W):
    """One v3Baiscblock layer. x_flat: (N,C,HW), res_flat: (N,3,HW) -> (N,C+3,HW)."""
    N, C, HW = x_flat.shape
    Cc = C + 3
    body_acts = tuple(bool(a) for (_, _, a) in body)

    # Body weights stacked with a leading per-block dim; taps laid out (C, 9).
    bdw = jnp.stack([dw.reshape(C, 9) for (dw, _, _) in body])
    bpw = jnp.stack([pw.reshape(C, C) for (_, pw, _) in body])

    # Fold ShuffleBlock(groups=3) into the first head block's weights:
    # shuffled input x'[c] = cat[perm[c]]  =>  dw_new[k] = dw[inv_perm[k]],
    # pw_new[:, k] = pw[:, inv_perm[k]], with inv_perm as below.
    inv_perm = np.arange(Cc).reshape(Cc // 3, 3).T.reshape(-1)
    dw0 = head[0][0].reshape(Cc, 9)[inv_perm]
    pw0 = head[0][1].reshape(Cc, Cc)[:, inv_perm]
    h1dw = head[1][0].reshape(Cc, 9)
    h1pw = head[1][1].reshape(Cc, Cc)

    # Edge-validity masks over the flattened spatial axis.
    w_idx = jnp.tile(jnp.arange(W, dtype=jnp.int32), H)
    h_idx = jnp.repeat(jnp.arange(H, dtype=jnp.int32), W)
    masks = jnp.stack([w_idx != 0, w_idx != W - 1, h_idx != 0, h_idx != H - 1],
                      axis=0).astype(jnp.float32)

    call = _layer_call(N, C, H, W, body_acts, x_flat.dtype)
    return call(x_flat, res_flat, bdw, bpw,
                dw0[:3], dw0[3:], pw0[:, :3], pw0[:, 3:],
                h1dw, h1pw, masks)


# ----------------------- plain-JAX glue (layout ops) -----------------------

def channel_shuffle(x, groups):
    """ShuffleBlock (reference path only): [N,C,H,W] group permute."""
    N, C, H, W = x.shape
    x = x.reshape(N, groups, C // groups, H, W)
    x = jnp.transpose(x, (0, 2, 1, 3, 4))
    return x.reshape(N, C, H, W)


def pixel_shuffle(x, r):
    """nn.PixelShuffle(r): (N, C*r^2, H, W) -> (N, C, H*r, W*r)."""
    N, C, H, W = x.shape
    c = C // (r * r)
    x = x.reshape(N, c, r, r, H, W)
    x = jnp.transpose(x, (0, 1, 4, 2, 5, 3))
    return x.reshape(N, c, H * r, W * r)


# ----------------------- Pallas full-model forward -----------------------

def abpn_v3_forward_pallas(x, params, scale_ratio=4):
    """ABPNv3.forward with one fused pallas_call per v3Baiscblock layer."""
    N, _, H, W = x.shape
    res_flat = x.reshape(N, 3, H * W)
    cur = res_flat
    for body, head in params:
        cur = layer_pallas(cur, res_flat, body, head, H, W)
    cur = cur.reshape(N, cur.shape[1], H, W)
    return pixel_shuffle(cur, scale_ratio)


# ----------------------- reference (torch semantics) -----------------------

def basic_block_ref(x, dw, pw, act):
    C = x.shape[1]
    y = jax.lax.conv_general_dilated(
        x, dw, window_strides=(1, 1), padding=((1, 1), (1, 1)),
        feature_group_count=C,
        dimension_numbers=("NCHW", "OIHW", "NCHW"),
        precision=jax.lax.Precision.HIGHEST)
    y = jax.nn.gelu(y, approximate=False)
    y = jax.lax.conv_general_dilated(
        y, pw, window_strides=(1, 1), padding=((0, 0), (0, 0)),
        dimension_numbers=("NCHW", "OIHW", "NCHW"),
        precision=jax.lax.Precision.HIGHEST)
    if act:
        y = jax.nn.gelu(y, approximate=False)
    return y


def abpn_v3_forward_ref(x, params, scale_ratio=4):
    residual = x
    for body, head in params:
        h = x
        for dw, pw, act in body:                    # v3Baiscblock.body
            h = basic_block_ref(h, dw, pw, act)
        h = jnp.concatenate([residual, h], axis=1)  # torch.cat([residual, x], 1)
        h = channel_shuffle(h, 3)                   # ShuffleBlock(groups=3)
        for dw, pw, act in head:                    # v3Baiscblock.head
            h = basic_block_ref(h, dw, pw, act)
        x = h
    return pixel_shuffle(x, scale_ratio)            # nn.PixelShuffle(scale_ratio)


# ----------------------- parameter init -----------------------

def init_params(key, scale_ratio=4, rep=4):
    """Weights for ABPNv3(scale_ratio, rep): scale_ratio^2 - 1 v3Baiscblock layers."""
    def block_params(k, C):
        k1, k2 = jax.random.split(k)
        dw = jax.random.normal(k1, (C, 1, 3, 3), jnp.float32) * 0.5
        pw = jax.random.normal(k2, (C, C, 1, 1), jnp.float32) * (1.4 / (C ** 0.5))
        return dw, pw

    n_layers = scale_ratio ** 2 - 1
    layers = []
    for li in range(n_layers):
        cin = 3 * (li + 1)
        body, head = [], []
        for _ in range(rep - 2):                    # basicBlock(cin, cin), GELU
            key, sub = jax.random.split(key)
            dw, pw = block_params(sub, cin)
            body.append((dw, pw, True))
        key, sub = jax.random.split(key)            # basicBlock(cin, cin, act=False)
        dw, pw = block_params(sub, cin)
        body.append((dw, pw, False))
        for _ in range(2):                          # head: 2x basicBlock(cin+3, cin+3)
            key, sub = jax.random.split(key)
            dw, pw = block_params(sub, cin + 3)
            head.append((dw, pw, True))
        layers.append((body, head))
    return layers


if __name__ == "__main__":
    N, H, W = 2, 16, 16
    SCALE, REP = 4, 4                               # ABPNv3 defaults -> 15 layers

    key = jax.random.PRNGKey(0)
    key, kx = jax.random.split(key)
    x = jax.random.normal(kx, (N, 3, H, W), dtype=jnp.float32)
    params = init_params(key, scale_ratio=SCALE, rep=REP)

    out = abpn_v3_forward_pallas(x, params, scale_ratio=SCALE)
    out = jax.block_until_ready(out)

    ref = abpn_v3_forward_ref(x, params, scale_ratio=SCALE)
    ref = jax.block_until_ready(ref)

    assert out.shape == (N, 3, H * SCALE, W * SCALE), out.shape
    # 1e-2 relative budget covers the tanh-GELU (EUP) vs exact-erf difference.
    err = float(jnp.max(jnp.abs(out - ref)))
    scale = float(jnp.max(jnp.abs(ref)))
    assert err <= 1e-2 * (scale + 1e-6), (err, scale)

    print("KERNEL_OK")
</pallas_src>

<mosaic_0001>
module attributes {stable_mosaic.version = 11 : i64} {
  func.func @kernel(%arg0: i32, %arg1: memref<1x3x256xf32, #tpu.memory_space<vmem>>, %arg2: memref<1x3x256xf32, #tpu.memory_space<vmem>>, %arg3: memref<3x3x9xf32, #tpu.memory_space<vmem>>, %arg4: memref<3x3x3xf32, #tpu.memory_space<vmem>>, %arg5: memref<3x9xf32, #tpu.memory_space<vmem>>, %arg6: memref<3x9xf32, #tpu.memory_space<vmem>>, %arg7: memref<6x3xf32, #tpu.memory_space<vmem>>, %arg8: memref<6x3xf32, #tpu.memory_space<vmem>>, %arg9: memref<6x9xf32, #tpu.memory_space<vmem>>, %arg10: memref<6x6xf32, #tpu.memory_space<vmem>>, %arg11: memref<4x256xf32, #tpu.memory_space<vmem>>, %arg12: memref<1x6x256xf32, #tpu.memory_space<vmem>>) attributes {dimension_semantics = [#tpu.dimension_semantics<parallel>], iteration_bounds = array<i64: 2>, scalar_prefetch = 0 : i64, scratch_operands = 0 : i64, tpu.core_type = #tpu.core_type<tc>, window_params = [{transform_indices = @transform_0, window_bounds = array<i64: 1, 3, 256>}, {transform_indices = @transform_1, window_bounds = array<i64: 1, 3, 256>}, {pipeline_mode = #tpu.pipeline_mode<synchronous>, transform_indices = @transform_2, window_bounds = array<i64: 3, 3, 9>}, {pipeline_mode = #tpu.pipeline_mode<synchronous>, transform_indices = @transform_3, window_bounds = array<i64: 3, 3, 3>}, {pipeline_mode = #tpu.pipeline_mode<synchronous>, transform_indices = @transform_4, window_bounds = array<i64: 3, 9>}, {pipeline_mode = #tpu.pipeline_mode<synchronous>, transform_indices = @transform_5, window_bounds = array<i64: 3, 9>}, {pipeline_mode = #tpu.pipeline_mode<synchronous>, transform_indices = @transform_6, window_bounds = array<i64: 6, 3>}, {pipeline_mode = #tpu.pipeline_mode<synchronous>, transform_indices = @transform_7, window_bounds = array<i64: 6, 3>}, {pipeline_mode = #tpu.pipeline_mode<synchronous>, transform_indices = @transform_8, window_bounds = array<i64: 6, 9>}, {pipeline_mode = #tpu.pipeline_mode<synchronous>, transform_indices = @transform_9, window_bounds = array<i64: 6, 6>}, {pipeline_mode = #tpu.pipeline_mode<synchronous>, transform_indices = @transform_10, window_bounds = array<i64: 4, 256>}, {transform_indices = @transform_11, window_bounds = array<i64: 1, 6, 256>}]} {
    %c0 = arith.constant 0 : index
    %c0_0 = arith.constant 0 : index
    %0 = vector.load %arg11[%c0, %c0_0] : memref<4x256xf32, #tpu.memory_space<vmem>>, vector<1x256xf32>
    %c1 = arith.constant 1 : index
    %c0_1 = arith.constant 0 : index
    %1 = vector.load %arg11[%c1, %c0_1] : memref<4x256xf32, #tpu.memory_space<vmem>>, vector<1x256xf32>
    %c2 = arith.constant 2 : index
    %c0_2 = arith.constant 0 : index
    %2 = vector.load %arg11[%c2, %c0_2] : memref<4x256xf32, #tpu.memory_space<vmem>>, vector<1x256xf32>
    %c3 = arith.constant 3 : index
    %c0_3 = arith.constant 0 : index
    %3 = vector.load %arg11[%c3, %c0_3] : memref<4x256xf32, #tpu.memory_space<vmem>>, vector<1x256xf32>
    %c0_4 = arith.constant 0 : index
    %c0_5 = arith.constant 0 : index
    %c0_6 = arith.constant 0 : index
    %4 = vector.load %arg1[%c0_4, %c0_5, %c0_6] : memref<1x3x256xf32, #tpu.memory_space<vmem>>, vector<1x3x256xf32>
    %5 = vector.shape_cast %4 : vector<1x3x256xf32> to vector<3x256xf32>
    %c0_7 = arith.constant 0 : index
    %c0_8 = arith.constant 0 : index
    %c0_9 = arith.constant 0 : index
    %6 = vector.load %arg3[%c0_7, %c0_8, %c0_9] : memref<3x3x9xf32, #tpu.memory_space<vmem>>, vector<1x3x9xf32>
    %7 = vector.shape_cast %6 : vector<1x3x9xf32> to vector<3x9xf32>
    %c1_i32 = arith.constant 1 : i32
    %8 = tpu.dynamic_rotate %5 by %c1_i32 dim 1 : vector<3x256xf32>, i32 -> vector<3x256xf32>
    %9 = vector.broadcast %0 : vector<1x256xf32> to vector<3x256xf32>
    %10 = arith.mulf %8, %9 : vector<3x256xf32>
    %c255_i32 = arith.constant 255 : i32
    %11 = tpu.dynamic_rotate %5 by %c255_i32 dim 1 : vector<3x256xf32>, i32 -> vector<3x256xf32>
    %12 = vector.broadcast %1 : vector<1x256xf32> to vector<3x256xf32>
    %13 = arith.mulf %11, %12 : vector<3x256xf32>
    %14 = vector.extract_strided_slice %7 {offsets = [0, 0], sizes = [3, 1], strides = [1, 1]} : vector<3x9xf32> to vector<3x1xf32>
    %15 = vector.broadcast %14 : vector<3x1xf32> to vector<3x256xf32>
    %16 = arith.mulf %10, %15 : vector<3x256xf32>
    %17 = vector.extract_strided_slice %7 {offsets = [0, 1], sizes = [3, 1], strides = [1, 1]} : vector<3x9xf32> to vector<3x1xf32>
    %18 = vector.broadcast %17 : vector<3x1xf32> to vector<3x256xf32>
    %19 = arith.mulf %5, %18 : vector<3x256xf32>
    %20 = arith.addf %16, %19 : vector<3x256xf32>
    %21 = vector.extract_strided_slice %7 {offsets = [0, 2], sizes = [3, 1], strides = [1, 1]} : vector<3x9xf32> to vector<3x1xf32>
    %22 = vector.broadcast %21 : vector<3x1xf32> to vector<3x256xf32>
    %23 = arith.mulf %13, %22 : vector<3x256xf32>
    %24 = arith.addf %20, %23 : vector<3x256xf32>
    %25 = vector.extract_strided_slice %7 {offsets = [0, 3], sizes = [3, 1], strides = [1, 1]} : vector<3x9xf32> to vector<3x1xf32>
    %26 = vector.broadcast %25 : vector<3x1xf32> to vector<3x256xf32>
    %27 = arith.mulf %10, %26 : vector<3x256xf32>
    %28 = vector.extract_strided_slice %7 {offsets = [0, 4], sizes = [3, 1], strides = [1, 1]} : vector<3x9xf32> to vector<3x1xf32>
    %29 = vector.broadcast %28 : vector<3x1xf32> to vector<3x256xf32>
    %30 = arith.mulf %5, %29 : vector<3x256xf32>
    %31 = arith.addf %27, %30 : vector<3x256xf32>
    %32 = vector.extract_strided_slice %7 {offsets = [0, 5], sizes = [3, 1], strides = [1, 1]} : vector<3x9xf32> to vector<3x1xf32>
    %33 = vector.broadcast %32 : vector<3x1xf32> to vector<3x256xf32>
    %34 = arith.mulf %13, %33 : vector<3x256xf32>
    %35 = arith.addf %31, %34 : vector<3x256xf32>
    %36 = vector.extract_strided_slice %7 {offsets = [0, 6], sizes = [3, 1], strides = [1, 1]} : vector<3x9xf32> to vector<3x1xf32>
    %37 = vector.broadcast %36 : vector<3x1xf32> to vector<3x256xf32>
    %38 = arith.mulf %10, %37 : vector<3x256xf32>
    %39 = vector.extract_strided_slice %7 {offsets = [0, 7], sizes = [3, 1], strides = [1, 1]} : vector<3x9xf32> to vector<3x1xf32>
    %40 = vector.broadcast %39 : vector<3x1xf32> to vector<3x256xf32>
    %41 = arith.mulf %5, %40 : vector<3x256xf32>
    %42 = arith.addf %38, %41 : vector<3x256xf32>
    %43 = vector.extract_strided_slice %7 {offsets = [0, 8], sizes = [3, 1], strides = [1, 1]} : vector<3x9xf32> to vector<3x1xf32>
    %44 = vector.broadcast %43 : vector<3x1xf32> to vector<3x256xf32>
    %45 = arith.mulf %13, %44 : vector<3x256xf32>
    %46 = arith.addf %42, %45 : vector<3x256xf32>
    %c16_i32 = arith.constant 16 : i32
    %47 = tpu.dynamic_rotate %24 by %c16_i32 dim 1 : vector<3x256xf32>, i32 -> vector<3x256xf32>
    %48 = vector.broadcast %2 : vector<1x256xf32> to vector<3x256xf32>
    %49 = arith.mulf %48, %47 : vector<3x256xf32>
    %50 = arith.addf %35, %49 : vector<3x256xf32>
    %c240_i32 = arith.constant 240 : i32
    %51 = tpu.dynamic_rotate %46 by %c240_i32 dim 1 : vector<3x256xf32>, i32 -> vector<3x256xf32>
    %52 = vector.broadcast %3 : vector<1x256xf32> to vector<3x256xf32>
    %53 = arith.mulf %52, %51 : vector<3x256xf32>
    %54 = arith.addf %50, %53 : vector<3x256xf32>
    %55 = arith.mulf %54, %54 : vector<3x256xf32>
    %56 = arith.mulf %54, %55 : vector<3x256xf32>
    %cst = arith.constant 4.471500e-02 : f32
    %57 = vector.broadcast %cst : f32 to vector<3x256xf32>
    %58 = arith.mulf %57, %56 : vector<3x256xf32>
    %59 = arith.addf %54, %58 : vector<3x256xf32>
    %cst_10 = arith.constant 0.797884583 : f32
    %60 = vector.broadcast %cst_10 : f32 to vector<3x256xf32>
    %61 = arith.mulf %60, %59 : vector<3x256xf32>
    %62 = math.tanh %61 : vector<3x256xf32>
    %cst_11 = arith.constant 1.000000e+00 : f32
    %63 = vector.broadcast %cst_11 : f32 to vector<3x256xf32>
    %64 = arith.addf %63, %62 : vector<3x256xf32>
    %cst_12 = arith.constant 5.000000e-01 : f32
    %65 = vector.broadcast %cst_12 : f32 to vector<3x256xf32>
    %66 = arith.mulf %65, %64 : vector<3x256xf32>
    %67 = arith.mulf %54, %66 : vector<3x256xf32>
    %c0_13 = arith.constant 0 : index
    %c0_14 = arith.constant 0 : index
    %c0_15 = arith.constant 0 : index
    %68 = vector.load %arg4[%c0_13, %c0_14, %c0_15] : memref<3x3x3xf32, #tpu.memory_space<vmem>>, vector<1x3x3xf32>
    %69 = vector.shape_cast %68 : vector<1x3x3xf32> to vector<3x3xf32>
    %cst_16 = arith.constant dense<0.000000e+00> : vector<3x256xf32>
    %70 = tpu.matmul %69, %67, %cst_16 {dimension_numbers = #tpu.dot_dimension_numbers<[1], [0], [0], [1], [0, 0, 1, 1], [], []>} : vector<3x3xf32>, vector<3x256xf32>, vector<3x256xf32> -> vector<3x256xf32>
    %71 = arith.mulf %70, %70 : vector<3x256xf32>
    %72 = arith.mulf %70, %71 : vector<3x256xf32>
    %cst_17 = arith.constant 4.471500e-02 : f32
    %73 = vector.broadcast %cst_17 : f32 to vector<3x256xf32>
    %74 = arith.mulf %73, %72 : vector<3x256xf32>
    %75 = arith.addf %70, %74 : vector<3x256xf32>
    %cst_18 = arith.constant 0.797884583 : f32
    %76 = vector.broadcast %cst_18 : f32 to vector<3x256xf32>
    %77 = arith.mulf %76, %75 : vector<3x256xf32>
    %78 = math.tanh %77 : vector<3x256xf32>
    %cst_19 = arith.constant 1.000000e+00 : f32
    %79 = vector.broadcast %cst_19 : f32 to vector<3x256xf32>
    %80 = arith.addf %79, %78 : vector<3x256xf32>
    %cst_20 = arith.constant 5.000000e-01 : f32
    %81 = vector.broadcast %cst_20 : f32 to vector<3x256xf32>
    %82 = arith.mulf %81, %80 : vector<3x256xf32>
    %83 = arith.mulf %70, %82 : vector<3x256xf32>
    %c1_21 = arith.constant 1 : index
    %c0_22 = arith.constant 0 : index
    %c0_23 = arith.constant 0 : index
    %84 = vector.load %arg3[%c1_21, %c0_22, %c0_23] : memref<3x3x9xf32, #tpu.memory_space<vmem>>, vector<1x3x9xf32>
    %85 = vector.shape_cast %84 : vector<1x3x9xf32> to vector<3x9xf32>
    %c1_i32_24 = arith.constant 1 : i32
    %86 = tpu.dynamic_rotate %83 by %c1_i32_24 dim 1 : vector<3x256xf32>, i32 -> vector<3x256xf32>
    %87 = vector.broadcast %0 : vector<1x256xf32> to vector<3x256xf32>
    %88 = arith.mulf %86, %87 : vector<3x256xf32>
    %c255_i32_25 = arith.constant 255 : i32
    %89 = tpu.dynamic_rotate %83 by %c255_i32_25 dim 1 : vector<3x256xf32>, i32 -> vector<3x256xf32>
    %90 = vector.broadcast %1 : vector<1x256xf32> to vector<3x256xf32>
    %91 = arith.mulf %89, %90 : vector<3x256xf32>
    %92 = vector.extract_strided_slice %85 {offsets = [0, 0], sizes = [3, 1], strides = [1, 1]} : vector<3x9xf32> to vector<3x1xf32>
    %93 = vector.broadcast %92 : vector<3x1xf32> to vector<3x256xf32>
    %94 = arith.mulf %88, %93 : vector<3x256xf32>
    %95 = vector.extract_strided_slice %85 {offsets = [0, 1], sizes = [3, 1], strides = [1, 1]} : vector<3x9xf32> to vector<3x1xf32>
    %96 = vector.broadcast %95 : vector<3x1xf32> to vector<3x256xf32>
    %97 = arith.mulf %83, %96 : vector<3x256xf32>
    %98 = arith.addf %94, %97 : vector<3x256xf32>
    %99 = vector.extract_strided_slice %85 {offsets = [0, 2], sizes = [3, 1], strides = [1, 1]} : vector<3x9xf32> to vector<3x1xf32>
    %100 = vector.broadcast %99 : vector<3x1xf32> to vector<3x256xf32>
    %101 = arith.mulf %91, %100 : vector<3x256xf32>
    %102 = arith.addf %98, %101 : vector<3x256xf32>
    %103 = vector.extract_strided_slice %85 {offsets = [0, 3], sizes = [3, 1], strides = [1, 1]} : vector<3x9xf32> to vector<3x1xf32>
    %104 = vector.broadcast %103 : vector<3x1xf32> to vector<3x256xf32>
    %105 = arith.mulf %88, %104 : vector<3x256xf32>
    %106 = vector.extract_strided_slice %85 {offsets = [0, 4], sizes = [3, 1], strides = [1, 1]} : vector<3x9xf32> to vector<3x1xf32>
    %107 = vector.broadcast %106 : vector<3x1xf32> to vector<3x256xf32>
    %108 = arith.mulf %83, %107 : vector<3x256xf32>
    %109 = arith.addf %105, %108 : vector<3x256xf32>
    %110 = vector.extract_strided_slice %85 {offsets = [0, 5], sizes = [3, 1], strides = [1, 1]} : vector<3x9xf32> to vector<3x1xf32>
    %111 = vector.broadcast %110 : vector<3x1xf32> to vector<3x256xf32>
    %112 = arith.mulf %91, %111 : vector<3x256xf32>
    %113 = arith.addf %109, %112 : vector<3x256xf32>
    %114 = vector.extract_strided_slice %85 {offsets = [0, 6], sizes = [3, 1], strides = [1, 1]} : vector<3x9xf32> to vector<3x1xf32>
    %115 = vector.broadcast %114 : vector<3x1xf32> to vector<3x256xf32>
    %116 = arith.mulf %88, %115 : vector<3x256xf32>
    %117 = vector.extract_strided_slice %85 {offsets = [0, 7], sizes = [3, 1], strides = [1, 1]} : vector<3x9xf32> to vector<3x1xf32>
    %118 = vector.broadcast %117 : vector<3x1xf32> to vector<3x256xf32>
    %119 = arith.mulf %83, %118 : vector<3x256xf32>
    %120 = arith.addf %116, %119 : vector<3x256xf32>
    %121 = vector.extract_strided_slice %85 {offsets = [0, 8], sizes = [3, 1], strides = [1, 1]} : vector<3x9xf32> to vector<3x1xf32>
    %122 = vector.broadcast %121 : vector<3x1xf32> to vector<3x256xf32>
    %123 = arith.mulf %91, %122 : vector<3x256xf32>
    %124 = arith.addf %120, %123 : vector<3x256xf32>
    %c16_i32_26 = arith.constant 16 : i32
    %125 = tpu.dynamic_rotate %102 by %c16_i32_26 dim 1 : vector<3x256xf32>, i32 -> vector<3x256xf32>
    %126 = vector.broadcast %2 : vector<1x256xf32> to vector<3x256xf32>
    %127 = arith.mulf %126, %125 : vector<3x256xf32>
    %128 = arith.addf %113, %127 : vector<3x256xf32>
    %c240_i32_27 = arith.constant 240 : i32
    %129 = tpu.dynamic_rotate %124 by %c240_i32_27 dim 1 : vector<3x256xf32>, i32 -> vector<3x256xf32>
    %130 = vector.broadcast %3 : vector<1x256xf32> to vector<3x256xf32>
    %131 = arith.mulf %130, %129 : vector<3x256xf32>
    %132 = arith.addf %128, %131 : vector<3x256xf32>
    %133 = arith.mulf %132, %132 : vector<3x256xf32>
    %134 = arith.mulf %132, %133 : vector<3x256xf32>
    %cst_28 = arith.constant 4.471500e-02 : f32
    %135 = vector.broadcast %cst_28 : f32 to vector<3x256xf32>
    %136 = arith.mulf %135, %134 : vector<3x256xf32>
    %137 = arith.addf %132, %136 : vector<3x256xf32>
    %cst_29 = arith.constant 0.797884583 : f32
    %138 = vector.broadcast %cst_29 : f32 to vector<3x256xf32>
    %139 = arith.mulf %138, %137 : vector<3x256xf32>
    %140 = math.tanh %139 : vector<3x256xf32>
    %cst_30 = arith.constant 1.000000e+00 : f32
    %141 = vector.broadcast %cst_30 : f32 to vector<3x256xf32>
    %142 = arith.addf %141, %140 : vector<3x256xf32>
    %cst_31 = arith.constant 5.000000e-01 : f32
    %143 = vector.broadcast %cst_31 : f32 to vector<3x256xf32>
    %144 = arith.mulf %143, %142 : vector<3x256xf32>
    %145 = arith.mulf %132, %144 : vector<3x256xf32>
    %c1_32 = arith.constant 1 : index
    %c0_33 = arith.constant 0 : index
    %c0_34 = arith.constant 0 : index
    %146 = vector.load %arg4[%c1_32, %c0_33, %c0_34] : memref<3x3x3xf32, #tpu.memory_space<vmem>>, vector<1x3x3xf32>
    %147 = vector.shape_cast %146 : vector<1x3x3xf32> to vector<3x3xf32>
    %cst_35 = arith.constant dense<0.000000e+00> : vector<3x256xf32>
    %148 = tpu.matmul %147, %145, %cst_35 {dimension_numbers = #tpu.dot_dimension_numbers<[1], [0], [0], [1], [0, 0, 1, 1], [], []>} : vector<3x3xf32>, vector<3x256xf32>, vector<3x256xf32> -> vector<3x256xf32>
    %149 = arith.mulf %148, %148 : vector<3x256xf32>
    %150 = arith.mulf %148, %149 : vector<3x256xf32>
    %cst_36 = arith.constant 4.471500e-02 : f32
    %151 = vector.broadcast %cst_36 : f32 to vector<3x256xf32>
    %152 = arith.mulf %151, %150 : vector<3x256xf32>
    %153 = arith.addf %148, %152 : vector<3x256xf32>
    %cst_37 = arith.constant 0.797884583 : f32
    %154 = vector.broadcast %cst_37 : f32 to vector<3x256xf32>
    %155 = arith.mulf %154, %153 : vector<3x256xf32>
    %156 = math.tanh %155 : vector<3x256xf32>
    %cst_38 = arith.constant 1.000000e+00 : f32
    %157 = vector.broadcast %cst_38 : f32 to vector<3x256xf32>
    %158 = arith.addf %157, %156 : vector<3x256xf32>
    %cst_39 = arith.constant 5.000000e-01 : f32
    %159 = vector.broadcast %cst_39 : f32 to vector<3x256xf32>
    %160 = arith.mulf %159, %158 : vector<3x256xf32>
    %161 = arith.mulf %148, %160 : vector<3x256xf32>
    %c2_40 = arith.constant 2 : index
    %c0_41 = arith.constant 0 : index
    %c0_42 = arith.constant 0 : index
    %162 = vector.load %arg3[%c2_40, %c0_41, %c0_42] : memref<3x3x9xf32, #tpu.memory_space<vmem>>, vector<1x3x9xf32>
    %163 = vector.shape_cast %162 : vector<1x3x9xf32> to vector<3x9xf32>
    %c1_i32_43 = arith.constant 1 : i32
    %164 = tpu.dynamic_rotate %161 by %c1_i32_43 dim 1 : vector<3x256xf32>, i32 -> vector<3x256xf32>
    %165 = vector.broadcast %0 : vector<1x256xf32> to vector<3x256xf32>
    %166 = arith.mulf %164, %165 : vector<3x256xf32>
    %c255_i32_44 = arith.constant 255 : i32
    %167 = tpu.dynamic_rotate %161 by %c255_i32_44 dim 1 : vector<3x256xf32>, i32 -> vector<3x256xf32>
    %168 = vector.broadcast %1 : vector<1x256xf32> to vector<3x256xf32>
    %169 = arith.mulf %167, %168 : vector<3x256xf32>
    %170 = vector.extract_strided_slice %163 {offsets = [0, 0], sizes = [3, 1], strides = [1, 1]} : vector<3x9xf32> to vector<3x1xf32>
    %171 = vector.broadcast %170 : vector<3x1xf32> to vector<3x256xf32>
    %172 = arith.mulf %166, %171 : vector<3x256xf32>
    %173 = vector.extract_strided_slice %163 {offsets = [0, 1], sizes = [3, 1], strides = [1, 1]} : vector<3x9xf32> to vector<3x1xf32>
    %174 = vector.broadcast %173 : vector<3x1xf32> to vector<3x256xf32>
    %175 = arith.mulf %161, %174 : vector<3x256xf32>
    %176 = arith.addf %172, %175 : vector<3x256xf32>
    %177 = vector.extract_strided_slice %163 {offsets = [0, 2], sizes = [3, 1], strides = [1, 1]} : vector<3x9xf32> to vector<3x1xf32>
    %178 = vector.broadcast %177 : vector<3x1xf32> to vector<3x256xf32>
    %179 = arith.mulf %169, %178 : vector<3x256xf32>
    %180 = arith.addf %176, %179 : vector<3x256xf32>
    %181 = vector.extract_strided_slice %163 {offsets = [0, 3], sizes = [3, 1], strides = [1, 1]} : vector<3x9xf32> to vector<3x1xf32>
    %182 = vector.broadcast %181 : vector<3x1xf32> to vector<3x256xf32>
    %183 = arith.mulf %166, %182 : vector<3x256xf32>
    %184 = vector.extract_strided_slice %163 {offsets = [0, 4], sizes = [3, 1], strides = [1, 1]} : vector<3x9xf32> to vector<3x1xf32>
    %185 = vector.broadcast %184 : vector<3x1xf32> to vector<3x256xf32>
    %186 = arith.mulf %161, %185 : vector<3x256xf32>
    %187 = arith.addf %183, %186 : vector<3x256xf32>
    %188 = vector.extract_strided_slice %163 {offsets = [0, 5], sizes = [3, 1], strides = [1, 1]} : vector<3x9xf32> to vector<3x1xf32>
    %189 = vector.broadcast %188 : vector<3x1xf32> to vector<3x256xf32>
    %190 = arith.mulf %169, %189 : vector<3x256xf32>
    %191 = arith.addf %187, %190 : vector<3x256xf32>
    %192 = vector.extract_strided_slice %163 {offsets = [0, 6], sizes = [3, 1], strides = [1, 1]} : vector<3x9xf32> to vector<3x1xf32>
    %193 = vector.broadcast %192 : vector<3x1xf32> to vector<3x256xf32>
    %194 = arith.mulf %166, %193 : vector<3x256xf32>
    %195 = vector.extract_strided_slice %163 {offsets = [0, 7], sizes = [3, 1], strides = [1, 1]} : vector<3x9xf32> to vector<3x1xf32>
    %196 = vector.broadcast %195 : vector<3x1xf32> to vector<3x256xf32>
    %197 = arith.mulf %161, %196 : vector<3x256xf32>
    %198 = arith.addf %194, %197 : vector<3x256xf32>
    %199 = vector.extract_strided_slice %163 {offsets = [0, 8], sizes = [3, 1], strides = [1, 1]} : vector<3x9xf32> to vector<3x1xf32>
    %200 = vector.broadcast %199 : vector<3x1xf32> to vector<3x256xf32>
    %201 = arith.mulf %169, %200 : vector<3x256xf32>
    %202 = arith.addf %198, %201 : vector<3x256xf32>
    %c16_i32_45 = arith.constant 16 : i32
    %203 = tpu.dynamic_rotate %180 by %c16_i32_45 dim 1 : vector<3x256xf32>, i32 -> vector<3x256xf32>
    %204 = vector.broadcast %2 : vector<1x256xf32> to vector<3x256xf32>
    %205 = arith.mulf %204, %203 : vector<3x256xf32>
    %206 = arith.addf %191, %205 : vector<3x256xf32>
    %c240_i32_46 = arith.constant 240 : i32
    %207 = tpu.dynamic_rotate %202 by %c240_i32_46 dim 1 : vector<3x256xf32>, i32 -> vector<3x256xf32>
    %208 = vector.broadcast %3 : vector<1x256xf32> to vector<3x256xf32>
    %209 = arith.mulf %208, %207 : vector<3x256xf32>
    %210 = arith.addf %206, %209 : vector<3x256xf32>
    %211 = arith.mulf %210, %210 : vector<3x256xf32>
    %212 = arith.mulf %210, %211 : vector<3x256xf32>
    %cst_47 = arith.constant 4.471500e-02 : f32
    %213 = vector.broadcast %cst_47 : f32 to vector<3x256xf32>
    %214 = arith.mulf %213, %212 : vector<3x256xf32>
    %215 = arith.addf %210, %214 : vector<3x256xf32>
    %cst_48 = arith.constant 0.797884583 : f32
    %216 = vector.broadcast %cst_48 : f32 to vector<3x256xf32>
    %217 = arith.mulf %216, %215 : vector<3x256xf32>
    %218 = math.tanh %217 : vector<3x256xf32>
    %cst_49 = arith.constant 1.000000e+00 : f32
    %219 = vector.broadcast %cst_49 : f32 to vector<3x256xf32>
    %220 = arith.addf %219, %218 : vector<3x256xf32>
    %cst_50 = arith.constant 5.000000e-01 : f32
    %221 = vector.broadcast %cst_50 : f32 to vector<3x256xf32>
    %222 = arith.mulf %221, %220 : vector<3x256xf32>
    %223 = arith.mulf %210, %222 : vector<3x256xf32>
    %c2_51 = arith.constant 2 : index
    %c0_52 = arith.constant 0 : index
    %c0_53 = arith.constant 0 : index
    %224 = vector.load %arg4[%c2_51, %c0_52, %c0_53] : memref<3x3x3xf32, #tpu.memory_space<vmem>>, vector<1x3x3xf32>
    %225 = vector.shape_cast %224 : vector<1x3x3xf32> to vector<3x3xf32>
    %cst_54 = arith.constant dense<0.000000e+00> : vector<3x256xf32>
    %226 = tpu.matmul %225, %223, %cst_54 {dimension_numbers = #tpu.dot_dimension_numbers<[1], [0], [0], [1], [0, 0, 1, 1], [], []>} : vector<3x3xf32>, vector<3x256xf32>, vector<3x256xf32> -> vector<3x256xf32>
    %c0_55 = arith.constant 0 : index
    %c0_56 = arith.constant 0 : index
    %c0_57 = arith.constant 0 : index
    %227 = vector.load %arg2[%c0_55, %c0_56, %c0_57] : memref<1x3x256xf32, #tpu.memory_space<vmem>>, vector<1x3x256xf32>
    %228 = vector.shape_cast %227 : vector<1x3x256xf32> to vector<3x256xf32>
    %c0_58 = arith.constant 0 : index
    %c0_59 = arith.constant 0 : index
    %229 = vector.load %arg5[%c0_58, %c0_59] : memref<3x9xf32, #tpu.memory_space<vmem>>, vector<3x9xf32>
    %c1_i32_60 = arith.constant 1 : i32
    %230 = tpu.dynamic_rotate %228 by %c1_i32_60 dim 1 : vector<3x256xf32>, i32 -> vector<3x256xf32>
    %231 = vector.broadcast %0 : vector<1x256xf32> to vector<3x256xf32>
    %232 = arith.mulf %230, %231 : vector<3x256xf32>
    %c255_i32_61 = arith.constant 255 : i32
    %233 = tpu.dynamic_rotate %228 by %c255_i32_61 dim 1 : vector<3x256xf32>, i32 -> vector<3x256xf32>
    %234 = vector.broadcast %1 : vector<1x256xf32> to vector<3x256xf32>
    %235 = arith.mulf %233, %234 : vector<3x256xf32>
    %236 = vector.extract_strided_slice %229 {offsets = [0, 0], sizes = [3, 1], strides = [1, 1]} : vector<3x9xf32> to vector<3x1xf32>
    %237 = vector.broadcast %236 : vector<3x1xf32> to vector<3x256xf32>
    %238 = arith.mulf %232, %237 : vector<3x256xf32>
    %239 = vector.extract_strided_slice %229 {offsets = [0, 1], sizes = [3, 1], strides = [1, 1]} : vector<3x9xf32> to vector<3x1xf32>
    %240 = vector.broadcast %239 : vector<3x1xf32> to vector<3x256xf32>
    %241 = arith.mulf %228, %240 : vector<3x256xf32>
    %242 = arith.addf %238, %241 : vector<3x256xf32>
    %243 = vector.extract_strided_slice %229 {offsets = [0, 2], sizes = [3, 1], strides = [1, 1]} : vector<3x9xf32> to vector<3x1xf32>
    %244 = vector.broadcast %243 : vector<3x1xf32> to vector<3x256xf32>
    %245 = arith.mulf %235, %244 : vector<3x256xf32>
    %246 = arith.addf %242, %245 : vector<3x256xf32>
    %247 = vector.extract_strided_slice %229 {offsets = [0, 3], sizes = [3, 1], strides = [1, 1]} : vector<3x9xf32> to vector<3x1xf32>
    %248 = vector.broadcast %247 : vector<3x1xf32> to vector<3x256xf32>
    %249 = arith.mulf %232, %248 : vector<3x256xf32>
    %250 = vector.extract_strided_slice %229 {offsets = [0, 4], sizes = [3, 1], strides = [1, 1]} : vector<3x9xf32> to vector<3x1xf32>
    %251 = vector.broadcast %250 : vector<3x1xf32> to vector<3x256xf32>
    %252 = arith.mulf %228, %251 : vector<3x256xf32>
    %253 = arith.addf %249, %252 : vector<3x256xf32>
    %254 = vector.extract_strided_slice %229 {offsets = [0, 5], sizes = [3, 1], strides = [1, 1]} : vector<3x9xf32> to vector<3x1xf32>
    %255 = vector.broadcast %254 : vector<3x1xf32> to vector<3x256xf32>
    %256 = arith.mulf %235, %255 : vector<3x256xf32>
    %257 = arith.addf %253, %256 : vector<3x256xf32>
    %258 = vector.extract_strided_slice %229 {offsets = [0, 6], sizes = [3, 1], strides = [1, 1]} : vector<3x9xf32> to vector<3x1xf32>
    %259 = vector.broadcast %258 : vector<3x1xf32> to vector<3x256xf32>
    %260 = arith.mulf %232, %259 : vector<3x256xf32>
    %261 = vector.extract_strided_slice %229 {offsets = [0, 7], sizes = [3, 1], strides = [1, 1]} : vector<3x9xf32> to vector<3x1xf32>
    %262 = vector.broadcast %261 : vector<3x1xf32> to vector<3x256xf32>
    %263 = arith.mulf %228, %262 : vector<3x256xf32>
    %264 = arith.addf %260, %263 : vector<3x256xf32>
    %265 = vector.extract_strided_slice %229 {offsets = [0, 8], sizes = [3, 1], strides = [1, 1]} : vector<3x9xf32> to vector<3x1xf32>
    %266 = vector.broadcast %265 : vector<3x1xf32> to vector<3x256xf32>
    %267 = arith.mulf %235, %266 : vector<3x256xf32>
    %268 = arith.addf %264, %267 : vector<3x256xf32>
    %c16_i32_62 = arith.constant 16 : i32
    %269 = tpu.dynamic_rotate %246 by %c16_i32_62 dim 1 : vector<3x256xf32>, i32 -> vector<3x256xf32>
    %270 = vector.broadcast %2 : vector<1x256xf32> to vector<3x256xf32>
    %271 = arith.mulf %270, %269 : vector<3x256xf32>
    %272 = arith.addf %257, %271 : vector<3x256xf32>
    %c240_i32_63 = arith.constant 240 : i32
    %273 = tpu.dynamic_rotate %268 by %c240_i32_63 dim 1 : vector<3x256xf32>, i32 -> vector<3x256xf32>
    %274 = vector.broadcast %3 : vector<1x256xf32> to vector<3x256xf32>
    %275 = arith.mulf %274, %273 : vector<3x256xf32>
    %276 = arith.addf %272, %275 : vector<3x256xf32>
    %277 = arith.mulf %276, %276 : vector<3x256xf32>
    %278 = arith.mulf %276, %277 : vector<3x256xf32>
    %cst_64 = arith.constant 4.471500e-02 : f32
    %279 = vector.broadcast %cst_64 : f32 to vector<3x256xf32>
    %280 = arith.mulf %279, %278 : vector<3x256xf32>
    %281 = arith.addf %276, %280 : vector<3x256xf32>
    %cst_65 = arith.constant 0.797884583 : f32
    %282 = vector.broadcast %cst_65 : f32 to vector<3x256xf32>
    %283 = arith.mulf %282, %281 : vector<3x256xf32>
    %284 = math.tanh %283 : vector<3x256xf32>
    %cst_66 = arith.constant 1.000000e+00 : f32
    %285 = vector.broadcast %cst_66 : f32 to vector<3x256xf32>
    %286 = arith.addf %285, %284 : vector<3x256xf32>
    %cst_67 = arith.constant 5.000000e-01 : f32
    %287 = vector.broadcast %cst_67 : f32 to vector<3x256xf32>
    %288 = arith.mulf %287, %286 : vector<3x256xf32>
    %289 = arith.mulf %276, %288 : vector<3x256xf32>
    %c0_68 = arith.constant 0 : index
    %c0_69 = arith.constant 0 : index
    %290 = vector.load %arg6[%c0_68, %c0_69] : memref<3x9xf32, #tpu.memory_space<vmem>>, vector<3x9xf32>
    %c1_i32_70 = arith.constant 1 : i32
    %291 = tpu.dynamic_rotate %226 by %c1_i32_70 dim 1 : vector<3x256xf32>, i32 -> vector<3x256xf32>
    %292 = vector.broadcast %0 : vector<1x256xf32> to vector<3x256xf32>
    %293 = arith.mulf %291, %292 : vector<3x256xf32>
    %c255_i32_71 = arith.constant 255 : i32
    %294 = tpu.dynamic_rotate %226 by %c255_i32_71 dim 1 : vector<3x256xf32>, i32 -> vector<3x256xf32>
    %295 = vector.broadcast %1 : vector<1x256xf32> to vector<3x256xf32>
    %296 = arith.mulf %294, %295 : vector<3x256xf32>
    %297 = vector.extract_strided_slice %290 {offsets = [0, 0], sizes = [3, 1], strides = [1, 1]} : vector<3x9xf32> to vector<3x1xf32>
    %298 = vector.broadcast %297 : vector<3x1xf32> to vector<3x256xf32>
    %299 = arith.mulf %293, %298 : vector<3x256xf32>
    %300 = vector.extract_strided_slice %290 {offsets = [0, 1], sizes = [3, 1], strides = [1, 1]} : vector<3x9xf32> to vector<3x1xf32>
    %301 = vector.broadcast %300 : vector<3x1xf32> to vector<3x256xf32>
    %302 = arith.mulf %226, %301 : vector<3x256xf32>
    %303 = arith.addf %299, %302 : vector<3x256xf32>
    %304 = vector.extract_strided_slice %290 {offsets = [0, 2], sizes = [3, 1], strides = [1, 1]} : vector<3x9xf32> to vector<3x1xf32>
    %305 = vector.broadcast %304 : vector<3x1xf32> to vector<3x256xf32>
    %306 = arith.mulf %296, %305 : vector<3x256xf32>
    %307 = arith.addf %303, %306 : vector<3x256xf32>
    %308 = vector.extract_strided_slice %290 {offsets = [0, 3], sizes = [3, 1], strides = [1, 1]} : vector<3x9xf32> to vector<3x1xf32>
    %309 = vector.broadcast %308 : vector<3x1xf32> to vector<3x256xf32>
    %310 = arith.mulf %293, %309 : vector<3x256xf32>
    %311 = vector.extract_strided_slice %290 {offsets = [0, 4], sizes = [3, 1], strides = [1, 1]} : vector<3x9xf32> to vector<3x1xf32>
    %312 = vector.broadcast %311 : vector<3x1xf32> to vector<3x256xf32>
    %313 = arith.mulf %226, %312 : vector<3x256xf32>
    %314 = arith.addf %310, %313 : vector<3x256xf32>
    %315 = vector.extract_strided_slice %290 {offsets = [0, 5], sizes = [3, 1], strides = [1, 1]} : vector<3x9xf32> to vector<3x1xf32>
    %316 = vector.broadcast %315 : vector<3x1xf32> to vector<3x256xf32>
    %317 = arith.mulf %296, %316 : vector<3x256xf32>
    %318 = arith.addf %314, %317 : vector<3x256xf32>
    %319 = vector.extract_strided_slice %290 {offsets = [0, 6], sizes = [3, 1], strides = [1, 1]} : vector<3x9xf32> to vector<3x1xf32>
    %320 = vector.broadcast %319 : vector<3x1xf32> to vector<3x256xf32>
    %321 = arith.mulf %293, %320 : vector<3x256xf32>
    %322 = vector.extract_strided_slice %290 {offsets = [0, 7], sizes = [3, 1], strides = [1, 1]} : vector<3x9xf32> to vector<3x1xf32>
    %323 = vector.broadcast %322 : vector<3x1xf32> to vector<3x256xf32>
    %324 = arith.mulf %226, %323 : vector<3x256xf32>
    %325 = arith.addf %321, %324 : vector<3x256xf32>
    %326 = vector.extract_strided_slice %290 {offsets = [0, 8], sizes = [3, 1], strides = [1, 1]} : vector<3x9xf32> to vector<3x1xf32>
    %327 = vector.broadcast %326 : vector<3x1xf32> to vector<3x256xf32>
    %328 = arith.mulf %296, %327 : vector<3x256xf32>
    %329 = arith.addf %325, %328 : vector<3x256xf32>
    %c16_i32_72 = arith.constant 16 : i32
    %330 = tpu.dynamic_rotate %307 by %c16_i32_72 dim 1 : vector<3x256xf32>, i32 -> vector<3x256xf32>
    %331 = vector.broadcast %2 : vector<1x256xf32> to vector<3x256xf32>
    %332 = arith.mulf %331, %330 : vector<3x256xf32>
    %333 = arith.addf %318, %332 : vector<3x256xf32>
    %c240_i32_73 = arith.constant 240 : i32
    %334 = tpu.dynamic_rotate %329 by %c240_i32_73 dim 1 : vector<3x256xf32>, i32 -> vector<3x256xf32>
    %335 = vector.broadcast %3 : vector<1x256xf32> to vector<3x256xf32>
    %336 = arith.mulf %335, %334 : vector<3x256xf32>
    %337 = arith.addf %333, %336 : vector<3x256xf32>
    %338 = arith.mulf %337, %337 : vector<3x256xf32>
    %339 = arith.mulf %337, %338 : vector<3x256xf32>
    %cst_74 = arith.constant 4.471500e-02 : f32
    %340 = vector.broadcast %cst_74 : f32 to vector<3x256xf32>
    %341 = arith.mulf %340, %339 : vector<3x256xf32>
    %342 = arith.addf %337, %341 : vector<3x256xf32>
    %cst_75 = arith.constant 0.797884583 : f32
    %343 = vector.broadcast %cst_75 : f32 to vector<3x256xf32>
    %344 = arith.mulf %343, %342 : vector<3x256xf32>
    %345 = math.tanh %344 : vector<3x256xf32>
    %cst_76 = arith.constant 1.000000e+00 : f32
    %346 = vector.broadcast %cst_76 : f32 to vector<3x256xf32>
    %347 = arith.addf %346, %345 : vector<3x256xf32>
    %cst_77 = arith.constant 5.000000e-01 : f32
    %348 = vector.broadcast %cst_77 : f32 to vector<3x256xf32>
    %349 = arith.mulf %348, %347 : vector<3x256xf32>
    %350 = arith.mulf %337, %349 : vector<3x256xf32>
    %c0_78 = arith.constant 0 : index
    %c0_79 = arith.constant 0 : index
    %351 = vector.load %arg7[%c0_78, %c0_79] : memref<6x3xf32, #tpu.memory_space<vmem>>, vector<6x3xf32>
    %cst_80 = arith.constant dense<0.000000e+00> : vector<6x256xf32>
    %352 = tpu.matmul %351, %289, %cst_80 {dimension_numbers = #tpu.dot_dimension_numbers<[1], [0], [0], [1], [0, 0, 1, 1], [], []>} : vector<6x3xf32>, vector<3x256xf32>, vector<6x256xf32> -> vector<6x256xf32>
    %c0_81 = arith.constant 0 : index
    %c0_82 = arith.constant 0 : index
    %353 = vector.load %arg8[%c0_81, %c0_82] : memref<6x3xf32, #tpu.memory_space<vmem>>, vector<6x3xf32>
    %cst_83 = arith.constant dense<0.000000e+00> : vector<6x256xf32>
    %354 = tpu.matmul %353, %350, %cst_83 {dimension_numbers = #tpu.dot_dimension_numbers<[1], [0], [0], [1], [0, 0, 1, 1], [], []>} : vector<6x3xf32>, vector<3x256xf32>, vector<6x256xf32> -> vector<6x256xf32>
    %355 = arith.addf %352, %354 : vector<6x256xf32>
    %356 = arith.mulf %355, %355 : vector<6x256xf32>
    %357 = arith.mulf %355, %356 : vector<6x256xf32>
    %cst_84 = arith.constant 4.471500e-02 : f32
    %358 = vector.broadcast %cst_84 : f32 to vector<6x256xf32>
    %359 = arith.mulf %358, %357 : vector<6x256xf32>
    %360 = arith.addf %355, %359 : vector<6x256xf32>
    %cst_85 = arith.constant 0.797884583 : f32
    %361 = vector.broadcast %cst_85 : f32 to vector<6x256xf32>
    %362 = arith.mulf %361, %360 : vector<6x256xf32>
    %363 = math.tanh %362 : vector<6x256xf32>
    %cst_86 = arith.constant 1.000000e+00 : f32
    %364 = vector.broadcast %cst_86 : f32 to vector<6x256xf32>
    %365 = arith.addf %364, %363 : vector<6x256xf32>
    %cst_87 = arith.constant 5.000000e-01 : f32
    %366 = vector.broadcast %cst_87 : f32 to vector<6x256xf32>
    %367 = arith.mulf %366, %365 : vector<6x256xf32>
    %368 = arith.mulf %355, %367 : vector<6x256xf32>
    %c0_88 = arith.constant 0 : index
    %c0_89 = arith.constant 0 : index
    %369 = vector.load %arg9[%c0_88, %c0_89] : memref<6x9xf32, #tpu.memory_space<vmem>>, vector<6x9xf32>
    %c1_i32_90 = arith.constant 1 : i32
    %370 = tpu.dynamic_rotate %368 by %c1_i32_90 dim 1 : vector<6x256xf32>, i32 -> vector<6x256xf32>
    %371 = vector.broadcast %0 : vector<1x256xf32> to vector<6x256xf32>
    %372 = arith.mulf %370, %371 : vector<6x256xf32>
    %c255_i32_91 = arith.constant 255 : i32
    %373 = tpu.dynamic_rotate %368 by %c255_i32_91 dim 1 : vector<6x256xf32>, i32 -> vector<6x256xf32>
    %374 = vector.broadcast %1 : vector<1x256xf32> to vector<6x256xf32>
    %375 = arith.mulf %373, %374 : vector<6x256xf32>
    %376 = vector.extract_strided_slice %369 {offsets = [0, 0], sizes = [6, 1], strides = [1, 1]} : vector<6x9xf32> to vector<6x1xf32>
    %377 = vector.broadcast %376 : vector<6x1xf32> to vector<6x256xf32>
    %378 = arith.mulf %372, %377 : vector<6x256xf32>
    %379 = vector.extract_strided_slice %369 {offsets = [0, 1], sizes = [6, 1], strides = [1, 1]} : vector<6x9xf32> to vector<6x1xf32>
    %380 = vector.broadcast %379 : vector<6x1xf32> to vector<6x256xf32>
    %381 = arith.mulf %368, %380 : vector<6x256xf32>
    %382 = arith.addf %378, %381 : vector<6x256xf32>
    %383 = vector.extract_strided_slice %369 {offsets = [0, 2], sizes = [6, 1], strides = [1, 1]} : vector<6x9xf32> to vector<6x1xf32>
    %384 = vector.broadcast %383 : vector<6x1xf32> to vector<6x256xf32>
    %385 = arith.mulf %375, %384 : vector<6x256xf32>
    %386 = arith.addf %382, %385 : vector<6x256xf32>
    %387 = vector.extract_strided_slice %369 {offsets = [0, 3], sizes = [6, 1], strides = [1, 1]} : vector<6x9xf32> to vector<6x1xf32>
    %388 = vector.broadcast %387 : vector<6x1xf32> to vector<6x256xf32>
    %389 = arith.mulf %372, %388 : vector<6x256xf32>
    %390 = vector.extract_strided_slice %369 {offsets = [0, 4], sizes = [6, 1], strides = [1, 1]} : vector<6x9xf32> to vector<6x1xf32>
    %391 = vector.broadcast %390 : vector<6x1xf32> to vector<6x256xf32>
    %392 = arith.mulf %368, %391 : vector<6x256xf32>
    %393 = arith.addf %389, %392 : vector<6x256xf32>
    %394 = vector.extract_strided_slice %369 {offsets = [0, 5], sizes = [6, 1], strides = [1, 1]} : vector<6x9xf32> to vector<6x1xf32>
    %395 = vector.broadcast %394 : vector<6x1xf32> to vector<6x256xf32>
    %396 = arith.mulf %375, %395 : vector<6x256xf32>
    %397 = arith.addf %393, %396 : vector<6x256xf32>
    %398 = vector.extract_strided_slice %369 {offsets = [0, 6], sizes = [6, 1], strides = [1, 1]} : vector<6x9xf32> to vector<6x1xf32>
    %399 = vector.broadcast %398 : vector<6x1xf32> to vector<6x256xf32>
    %400 = arith.mulf %372, %399 : vector<6x256xf32>
    %401 = vector.extract_strided_slice %369 {offsets = [0, 7], sizes = [6, 1], strides = [1, 1]} : vector<6x9xf32> to vector<6x1xf32>
    %402 = vector.broadcast %401 : vector<6x1xf32> to vector<6x256xf32>
    %403 = arith.mulf %368, %402 : vector<6x256xf32>
    %404 = arith.addf %400, %403 : vector<6x256xf32>
    %405 = vector.extract_strided_slice %369 {offsets = [0, 8], sizes = [6, 1], strides = [1, 1]} : vector<6x9xf32> to vector<6x1xf32>
    %406 = vector.broadcast %405 : vector<6x1xf32> to vector<6x256xf32>
    %407 = arith.mulf %375, %406 : vector<6x256xf32>
    %408 = arith.addf %404, %407 : vector<6x256xf32>
    %c16_i32_92 = arith.constant 16 : i32
    %409 = tpu.dynamic_rotate %386 by %c16_i32_92 dim 1 : vector<6x256xf32>, i32 -> vector<6x256xf32>
    %410 = vector.broadcast %2 : vector<1x256xf32> to vector<6x256xf32>
    %411 = arith.mulf %410, %409 : vector<6x256xf32>
    %412 = arith.addf %397, %411 : vector<6x256xf32>
    %c240_i32_93 = arith.constant 240 : i32
    %413 = tpu.dynamic_rotate %408 by %c240_i32_93 dim 1 : vector<6x256xf32>, i32 -> vector<6x256xf32>
    %414 = vector.broadcast %3 : vector<1x256xf32> to vector<6x256xf32>
    %415 = arith.mulf %414, %413 : vector<6x256xf32>
    %416 = arith.addf %412, %415 : vector<6x256xf32>
    %417 = arith.mulf %416, %416 : vector<6x256xf32>
    %418 = arith.mulf %416, %417 : vector<6x256xf32>
    %cst_94 = arith.constant 4.471500e-02 : f32
    %419 = vector.broadcast %cst_94 : f32 to vector<6x256xf32>
    %420 = arith.mulf %419, %418 : vector<6x256xf32>
    %421 = arith.addf %416, %420 : vector<6x256xf32>
    %cst_95 = arith.constant 0.797884583 : f32
    %422 = vector.broadcast %cst_95 : f32 to vector<6x256xf32>
    %423 = arith.mulf %422, %421 : vector<6x256xf32>
    %424 = math.tanh %423 : vector<6x256xf32>
    %cst_96 = arith.constant 1.000000e+00 : f32
    %425 = vector.broadcast %cst_96 : f32 to vector<6x256xf32>
    %426 = arith.addf %425, %424 : vector<6x256xf32>
    %cst_97 = arith.constant 5.000000e-01 : f32
    %427 = vector.broadcast %cst_97 : f32 to vector<6x256xf32>
    %428 = arith.mulf %427, %426 : vector<6x256xf32>
    %429 = arith.mulf %416, %428 : vector<6x256xf32>
    %c0_98 = arith.constant 0 : index
    %c0_99 = arith.constant 0 : index
    %430 = vector.load %arg10[%c0_98, %c0_99] : memref<6x6xf32, #tpu.memory_space<vmem>>, vector<6x6xf32>
    %cst_100 = arith.constant dense<0.000000e+00> : vector<6x256xf32>
    %431 = tpu.matmul %430, %429, %cst_100 {dimension_numbers = #tpu.dot_dimension_numbers<[1], [0], [0], [1], [0, 0, 1, 1], [], []>} : vector<6x6xf32>, vector<6x256xf32>, vector<6x256xf32> -> vector<6x256xf32>
    %432 = arith.mulf %431, %431 : vector<6x256xf32>
    %433 = arith.mulf %431, %432 : vector<6x256xf32>
    %cst_101 = arith.constant 4.471500e-02 : f32
    %434 = vector.broadcast %cst_101 : f32 to vector<6x256xf32>
    %435 = arith.mulf %434, %433 : vector<6x256xf32>
    %436 = arith.addf %431, %435 : vector<6x256xf32>
    %cst_102 = arith.constant 0.797884583 : f32
    %437 = vector.broadcast %cst_102 : f32 to vector<6x256xf32>
    %438 = arith.mulf %437, %436 : vector<6x256xf32>
    %439 = math.tanh %438 : vector<6x256xf32>
    %cst_103 = arith.constant 1.000000e+00 : f32
    %440 = vector.broadcast %cst_103 : f32 to vector<6x256xf32>
    %441 = arith.addf %440, %439 : vector<6x256xf32>
    %cst_104 = arith.constant 5.000000e-01 : f32
    %442 = vector.broadcast %cst_104 : f32 to vector<6x256xf32>
    %443 = arith.mulf %442, %441 : vector<6x256xf32>
    %444 = arith.mulf %431, %443 : vector<6x256xf32>
    %c0_105 = arith.constant 0 : index
    %c0_106 = arith.constant 0 : index
    %c0_107 = arith.constant 0 : index
    %445 = vector.load %arg12[%c0_105, %c0_106, %c0_107] : memref<1x6x256xf32, #tpu.memory_space<vmem>>, vector<1x6x256xf32>
    %446 = vector.shape_cast %445 : vector<1x6x256xf32> to vector<6x256xf32>
    %447 = vector.shape_cast %444 : vector<6x256xf32> to vector<1x6x256xf32>
    tpu.vector_store %arg12[%c0_105, %c0_106, %c0_107], %447 {strides = array<i32>} : memref<1x6x256xf32, #tpu.memory_space<vmem>>, vector<1x6x256xf32>,
    return
  }
  func.func @transform_0(%arg0: i32) -> (i32, i32, i32) {
    %c0_i32 = arith.constant 0 : i32
    %c0_i32_0 = arith.constant 0 : i32
    %c0_i32_1 = arith.constant 0 : i32
    return %arg0, %c0_i32, %c0_i32_0 : i32, i32, i32
  }
  func.func @transform_1(%arg0: i32) -> (i32, i32, i32) {
    %c0_i32 = arith.constant 0 : i32
    %c0_i32_0 = arith.constant 0 : i32
    %c0_i32_1 = arith.constant 0 : i32
    return %arg0, %c0_i32, %c0_i32_0 : i32, i32, i32
  }
  func.func @transform_2(%arg0: i32) -> (i32, i32, i32) {
    %c0_i32 = arith.constant 0 : i32
    %c0_i32_0 = arith.constant 0 : i32
    %c0_i32_1 = arith.constant 0 : i32
    %c0_i32_2 = arith.constant 0 : i32
    return %c0_i32, %c0_i32_0, %c0_i32_1 : i32, i32, i32
  }
  func.func @transform_3(%arg0: i32) -> (i32, i32, i32) {
    %c0_i32 = arith.constant 0 : i32
    %c0_i32_0 = arith.constant 0 : i32
    %c0_i32_1 = arith.constant 0 : i32
    %c0_i32_2 = arith.constant 0 : i32
    return %c0_i32, %c0_i32_0, %c0_i32_1 : i32, i32, i32
  }
  func.func @transform_4(%arg0: i32) -> (i32, i32) {
    %c0_i32 = arith.constant 0 : i32
    %c0_i32_0 = arith.constant 0 : i32
    %c0_i32_1 = arith.constant 0 : i32
    return %c0_i32, %c0_i32_0 : i32, i32
  }
  func.func @transform_5(%arg0: i32) -> (i32, i32) {
    %c0_i32 = arith.constant 0 : i32
    %c0_i32_0 = arith.constant 0 : i32
    %c0_i32_1 = arith.constant 0 : i32
    return %c0_i32, %c0_i32_0 : i32, i32
  }
  func.func @transform_6(%arg0: i32) -> (i32, i32) {
    %c0_i32 = arith.constant 0 : i32
    %c0_i32_0 = arith.constant 0 : i32
    %c0_i32_1 = arith.constant 0 : i32
    return %c0_i32, %c0_i32_0 : i32, i32
  }
  func.func @transform_7(%arg0: i32) -> (i32, i32) {
    %c0_i32 = arith.constant 0 : i32
    %c0_i32_0 = arith.constant 0 : i32
    %c0_i32_1 = arith.constant 0 : i32
    return %c0_i32, %c0_i32_0 : i32, i32
  }
  func.func @transform_8(%arg0: i32) -> (i32, i32) {
    %c0_i32 = arith.constant 0 : i32
    %c0_i32_0 = arith.constant 0 : i32
    %c0_i32_1 = arith.constant 0 : i32
    return %c0_i32, %c0_i32_0 : i32, i32
  }
  func.func @transform_9(%arg0: i32) -> (i32, i32) {
    %c0_i32 = arith.constant 0 : i32
    %c0_i32_0 = arith.constant 0 : i32
    %c0_i32_1 = arith.constant 0 : i32
    return %c0_i32, %c0_i32_0 : i32, i32
  }
  func.func @transform_10(%arg0: i32) -> (i32, i32) {
    %c0_i32 = arith.constant 0 : i32
    %c0_i32_0 = arith.constant 0 : i32
    %c0_i32_1 = arith.constant 0 : i32
    return %c0_i32, %c0_i32_0 : i32, i32
  }
  func.func @transform_11(%arg0: i32) -> (i32, i32, i32) {
    %c0_i32 = arith.constant 0 : i32
    %c0_i32_0 = arith.constant 0 : i32
    %c0_i32_1 = arith.constant 0 : i32
    return %arg0, %c0_i32, %c0_i32_0 : i32, i32, i32
  }
}

</mosaic_0001>

<llo_original>
// kernel: tpu_custom_call.1
$region0: #{tpu_custom_call.1}
  #allocation0 [shape = 'u32[]', space=smem, size = 0x4, offset = 0x4, fixed_abs, tag = 'smem constant byte address 0x4 - core index']
  #allocation1 [shape = 'u32[144,128]{1,0:T(1,128)}', space=vmem, size = 0x12000, scoped, tag = 'internal scratch']
  %s0 = inlined_call_operand.vmem [shape: f32[2,3,256], index: 0, kind: input, shape index: {}]
  %s1 = inlined_call_operand.vmem [shape: f32[2,3,256], index: 1, kind: input, shape index: {}]
  %s2 = inlined_call_operand.vmem [shape: f32[3,3,9], index: 2, kind: input, shape index: {}]
  %s3 = inlined_call_operand.vmem [shape: f32[3,3,3], index: 3, kind: input, shape index: {}]
  %s4 = inlined_call_operand.vmem [shape: f32[3,9], index: 4, kind: input, shape index: {}]
  %s5 = inlined_call_operand.vmem [shape: f32[3,9], index: 5, kind: input, shape index: {}]
  %s6 = inlined_call_operand.vmem [shape: f32[6,3], index: 6, kind: input, shape index: {}]
  %s7 = inlined_call_operand.vmem [shape: f32[6,3], index: 7, kind: input, shape index: {}]
  %s8 = inlined_call_operand.vmem [shape: f32[6,9], index: 8, kind: input, shape index: {}]
  %s9 = inlined_call_operand.vmem [shape: f32[6,6], index: 9, kind: input, shape index: {}]
  %s10 = inlined_call_operand.vmem [shape: f32[4,256], index: 10, kind: input, shape index: {}]
  %s11 = inlined_call_operand.vmem [shape: f32[2,6,256], index: 11, kind: output, shape index: {}]
  %s12 = sld [smem:[#allocation0]]
  $region77: #{tpu_custom_call.1} parent=0
    _
  %s14 = ssub.s32 1, %s12
  %s15 = scalar_select 0, %s14, %s12
  loop: start=0, step=1, limit=4
  $region2: #{tpu_custom_call.1} parent=0 // loop_pre_header
    _
  $region3: #{tpu_custom_call.1} parent=0 // loop_header
    %s17 = sphi 0, %s21
    %p18 = scmp.ge.s32.totalorder %s17, 4
    %s27 = sphi 0, %s29
    %s30 = sphi 0, %s27
    %s31 = sphi 0, %s30
    %s47 = sphi 0, %s31
    %s53 = sphi 0, %s55
    %s56 = sphi 0, %s53
    %s57 = sphi 0, %s56
    %s73 = sphi 0, %s57
    %s77 = sphi 0, %s77
    %s79 = sphi 0, %s77
    %s80 = sphi 0, %s79
    %s94 = sphi 0, %s80
    %s98 = sphi 0, %s98
    %s100 = sphi 0, %s98
    %s101 = sphi 0, %s100
    %s115 = sphi 0, %s101
    %s119 = sphi 0, %s119
    %s121 = sphi 0, %s119
    %s122 = sphi 0, %s121
    %s136 = sphi 0, %s122
    %s140 = sphi 0, %s140
    %s142 = sphi 0, %s140
    %s143 = sphi 0, %s142
    %s157 = sphi 0, %s143
    %s161 = sphi 0, %s161
    %s163 = sphi 0, %s161
    %s164 = sphi 0, %s163
    %s178 = sphi 0, %s164
    %s182 = sphi 0, %s182
    %s184 = sphi 0, %s182
    %s185 = sphi 0, %s184
    %s199 = sphi 0, %s185
    %s203 = sphi 0, %s203
    %s205 = sphi 0, %s203
    %s206 = sphi 0, %s205
    %s220 = sphi 0, %s206
    %s224 = sphi 0, %s224
    %s226 = sphi 0, %s224
    %s227 = sphi 0, %s226
    %s241 = sphi 0, %s227
    %s245 = sphi 0, %s245
    %s247 = sphi 0, %s245
    %s248 = sphi 0, %s247
    %s262 = sphi 0, %s248
    %s268 = sphi 0, %s270
    %s271 = sphi 0, %s268
    %s272 = sphi 0, %s271
    %s288 = sphi 0, %s272
  $region4: #{tpu_custom_call.1} parent=0 // loop_header_branch
    %20 = sbr.rel (%p18) target = $region8
  $region5: #{tpu_custom_call.1} parent=0 // loop_body
    %s22 = ssub.s32 %s17, 1
    %s23 = ssub.s32 %s17, 2
    %s24 = sadd.s32 %s17, 1
    %s25 = ssub.s32 %s17, %s24
    %p26 = scmp.eq.s32.totalorder %s25, 0
    %s28 = sadd.s32 %s27, 1
    %s29 = scalar_select %p26, %s27, %s28
    %p32 = pneg %p26
    %p33 = scmp.eq.s32.totalorder %s17, 1
    %p34 = por %p32, %p33
    %p35 = scmp.ne.s32.totalorder %s27, %s30
    %p36 = scmp.eq.s32.totalorder %s17, 0
    %p37 = por %p35, %p36
    %p38 = scmp.ne.s32.totalorder %s27, %s30
    %p39 = scmp.eq.s32.totalorder %s22, 1
    %p40 = por %p38, %p39
    %p41 = scmp.ne.s32.totalorder %s30, %s31
    %p42 = scmp.eq.s32.totalorder %s22, 0
    %p43 = por %p41, %p42
    %p44 = scmp.ne.s32.totalorder %s30, %s31
    %p45 = scmp.eq.s32.totalorder %s23, 1
    %p46 = por %p44, %p45
    %p48 = scmp.ne.s32.totalorder %s31, %s47
    %p49 = scmp.eq.s32.totalorder %s23, 0
    %p50 = por %p48, %p49
    %s51 = ssub.s32 %s17, %s24
    %p52 = scmp.eq.s32.totalorder %s51, 0
    %s54 = sadd.s32 %s53, 1
    %s55 = scalar_select %p52, %s53, %s54
    %p58 = pneg %p52
    %p59 = scmp.eq.s32.totalorder %s17, 1
    %p60 = por %p58, %p59
    %p61 = scmp.ne.s32.totalorder %s53, %s56
    %p62 = scmp.eq.s32.totalorder %s17, 0
    %p63 = por %p61, %p62
    %p64 = scmp.ne.s32.totalorder %s53, %s56
    %p65 = scmp.eq.s32.totalorder %s22, 1
    %p66 = por %p64, %p65
    %p67 = scmp.ne.s32.totalorder %s56, %s57
    %p68 = scmp.eq.s32.totalorder %s22, 0
    %p69 = por %p67, %p68
    %p70 = scmp.ne.s32.totalorder %s56, %s57
    %p71 = scmp.eq.s32.totalorder %s23, 1
    %p72 = por %p70, %p71
    %p74 = scmp.ne.s32.totalorder %s57, %s73
    %p75 = scmp.eq.s32.totalorder %s23, 0
    %p76 = por %p74, %p75
    %s78 = sadd.s32 %s77, 1
    %p81 = scmp.eq.s32.totalorder %s17, 1
    %p82 = scmp.ne.s32.totalorder %s77, %s79
    %p83 = scmp.eq.s32.totalorder %s17, 0
    %p84 = por %p82, %p83
    %p85 = scmp.ne.s32.totalorder %s77, %s79
    %p86 = scmp.eq.s32.totalorder %s22, 1
    %p87 = por %p85, %p86
    %p88 = scmp.ne.s32.totalorder %s79, %s80
    %p89 = scmp.eq.s32.totalorder %s22, 0
    %p90 = por %p88, %p89
    %p91 = scmp.ne.s32.totalorder %s79, %s80
    %p92 = scmp.eq.s32.totalorder %s23, 1
    %p93 = por %p91, %p92
    %p95 = scmp.ne.s32.totalorder %s80, %s94
    %p96 = scmp.eq.s32.totalorder %s23, 0
    %p97 = por %p95, %p96
    %s99 = sadd.s32 %s98, 1
    %p102 = scmp.eq.s32.totalorder %s17, 1
    %p103 = scmp.ne.s32.totalorder %s98, %s100
    %p104 = scmp.eq.s32.totalorder %s17, 0
    %p105 = por %p103, %p104
    %p106 = scmp.ne.s32.totalorder %s98, %s100
    %p107 = scmp.eq.s32.totalorder %s22, 1
    %p108 = por %p106, %p107
    %p109 = scmp.ne.s32.totalorder %s100, %s101
    %p110 = scmp.eq.s32.totalorder %s22, 0
    %p111 = por %p109, %p110
    %p112 = scmp.ne.s32.totalorder %s100, %s101
    %p113 = scmp.eq.s32.totalorder %s23, 1
    %p114 = por %p112, %p113
    %p116 = scmp.ne.s32.totalorder %s101, %s115
    %p117 = scmp.eq.s32.totalorder %s23, 0
    %p118 = por %p116, %p117
    %s120 = sadd.s32 %s119, 1
    %p123 = scmp.eq.s32.totalorder %s17, 1
    %p124 = scmp.ne.s32.totalorder %s119, %s121
    %p125 = scmp.eq.s32.totalorder %s17, 0
    %p126 = por %p124, %p125
    %p127 = scmp.ne.s32.totalorder %s119, %s121
    %p128 = scmp.eq.s32.totalorder %s22, 1
    %p129 = por %p127, %p128
    %p130 = scmp.ne.s32.totalorder %s121, %s122
    %p131 = scmp.eq.s32.totalorder %s22, 0
    %p132 = por %p130, %p131
    %p133 = scmp.ne.s32.totalorder %s121, %s122
    %p134 = scmp.eq.s32.totalorder %s23, 1
    %p135 = por %p133, %p134
    %p137 = scmp.ne.s32.totalorder %s122, %s136
    %p138 = scmp.eq.s32.totalorder %s23, 0
    %p139 = por %p137, %p138
    %s141 = sadd.s32 %s140, 1
    %p144 = scmp.eq.s32.totalorder %s17, 1
    %p145 = scmp.ne.s32.totalorder %s140, %s142
    %p146 = scmp.eq.s32.totalorder %s17, 0
    %p147 = por %p145, %p146
    %p148 = scmp.ne.s32.totalorder %s140, %s142
    %p149 = scmp.eq.s32.totalorder %s22, 1
    %p150 = por %p148, %p149
    %p151 = scmp.ne.s32.totalorder %s142, %s143
    %p152 = scmp.eq.s32.totalorder %s22, 0
    %p153 = por %p151, %p152
    %p154 = scmp.ne.s32.totalorder %s142, %s143
    %p155 = scmp.eq.s32.totalorder %s23, 1
    %p156 = por %p154, %p155
    %p158 = scmp.ne.s32.totalorder %s143, %s157
    %p159 = scmp.eq.s32.totalorder %s23, 0
    %p160 = por %p158, %p159
    %s162 = sadd.s32 %s161, 1
    %p165 = scmp.eq.s32.totalorder %s17, 1
    %p166 = scmp.ne.s32.totalorder %s161, %s163
    %p167 = scmp.eq.s32.totalorder %s17, 0
    %p168 = por %p166, %p167
    %p169 = scmp.ne.s32.totalorder %s161, %s163
    %p170 = scmp.eq.s32.totalorder %s22, 1
    %p171 = por %p169, %p170
    %p172 = scmp.ne.s32.totalorder %s163, %s164
    %p173 = scmp.eq.s32.totalorder %s22, 0
    %p174 = por %p172, %p173
    %p175 = scmp.ne.s32.totalorder %s163, %s164
    %p176 = scmp.eq.s32.totalorder %s23, 1
    %p177 = por %p175, %p176
    %p179 = scmp.ne.s32.totalorder %s164, %s178
    %p180 = scmp.eq.s32.totalorder %s23, 0
    %p181 = por %p179, %p180
    %s183 = sadd.s32 %s182, 1
    %p186 = scmp.eq.s32.totalorder %s17, 1
    %p187 = scmp.ne.s32.totalorder %s182, %s184
    %p188 = scmp.eq.s32.totalorder %s17, 0
    %p189 = por %p187, %p188
    %p190 = scmp.ne.s32.totalorder %s182, %s184
    %p191 = scmp.eq.s32.totalorder %s22, 1
    %p192 = por %p190, %p191
    %p193 = scmp.ne.s32.totalorder %s184, %s185
    %p194 = scmp.eq.s32.totalorder %s22, 0
    %p195 = por %p193, %p194
    %p196 = scmp.ne.s32.totalorder %s184, %s185
    %p197 = scmp.eq.s32.totalorder %s23, 1
    %p198 = por %p196, %p197
    %p200 = scmp.ne.s32.totalorder %s185, %s199
    %p201 = scmp.eq.s32.totalorder %s23, 0
    %p202 = por %p200, %p201
    %s204 = sadd.s32 %s203, 1
    %p207 = scmp.eq.s32.totalorder %s17, 1
    %p208 = scmp.ne.s32.totalorder %s203, %s205
    %p209 = scmp.eq.s32.totalorder %s17, 0
    %p210 = por %p208, %p209
    %p211 = scmp.ne.s32.totalorder %s203, %s205
    %p212 = scmp.eq.s32.totalorder %s22, 1
    %p213 = por %p211, %p212
    %p214 = scmp.ne.s32.totalorder %s205, %s206
    %p215 = scmp.eq.s32.totalorder %s22, 0
    %p216 = por %p214, %p215
    %p217 = scmp.ne.s32.totalorder %s205, %s206
    %p218 = scmp.eq.s32.totalorder %s23, 1
    %p219 = por %p217, %p218
    %p221 = scmp.ne.s32.totalorder %s206, %s220
    %p222 = scmp.eq.s32.totalorder %s23, 0
    %p223 = por %p221, %p222
    %s225 = sadd.s32 %s224, 1
    %p228 = scmp.eq.s32.totalorder %s17, 1
    %p229 = scmp.ne.s32.totalorder %s224, %s226
    %p230 = scmp.eq.s32.totalorder %s17, 0
    %p231 = por %p229, %p230
    %p232 = scmp.ne.s32.totalorder %s224, %s226
    %p233 = scmp.eq.s32.totalorder %s22, 1
    %p234 = por %p232, %p233
    %p235 = scmp.ne.s32.totalorder %s226, %s227
    %p236 = scmp.eq.s32.totalorder %s22, 0
    %p237 = por %p235, %p236
    %p238 = scmp.ne.s32.totalorder %s226, %s227
    %p239 = scmp.eq.s32.totalorder %s23, 1
    %p240 = por %p238, %p239
    %p242 = scmp.ne.s32.totalorder %s227, %s241
    %p243 = scmp.eq.s32.totalorder %s23, 0
    %p244 = por %p242, %p243
    %s246 = sadd.s32 %s245, 1
    %p249 = scmp.eq.s32.totalorder %s17, 1
    %p250 = scmp.ne.s32.totalorder %s245, %s247
    %p251 = scmp.eq.s32.totalorder %s17, 0
    %p252 = por %p250, %p251
    %p253 = scmp.ne.s32.totalorder %s245, %s247
    %p254 = scmp.eq.s32.totalorder %s22, 1
    %p255 = por %p253, %p254
    %p256 = scmp.ne.s32.totalorder %s247, %s248
    %p257 = scmp.eq.s32.totalorder %s22, 0
    %p258 = por %p256, %p257
    %p259 = scmp.ne.s32.totalorder %s247, %s248
    %p260 = scmp.eq.s32.totalorder %s23, 1
    %p261 = por %p259, %p260
    %p263 = scmp.ne.s32.totalorder %s248, %s262
    %p264 = scmp.eq.s32.totalorder %s23, 0
    %p265 = por %p263, %p264
    %s266 = ssub.s32 %s17, %s24
    %p267 = scmp.eq.s32.totalorder %s266, 0
    %s269 = sadd.s32 %s268, 1
    %s270 = scalar_select %p267, %s268, %s269
    %p273 = pneg %p267
    %p274 = scmp.eq.s32.totalorder %s17, 1
    %p275 = por %p273, %p274
    %p276 = scmp.ne.s32.totalorder %s268, %s271
    %p277 = scmp.eq.s32.totalorder %s17, 0
    %p278 = por %p276, %p277
    %p279 = scmp.ne.s32.totalorder %s268, %s271
    %p280 = scmp.eq.s32.totalorder %s22, 1
    %p281 = por %p279, %p280
    %p282 = scmp.ne.s32.totalorder %s271, %s272
    %p283 = scmp.eq.s32.totalorder %s22, 0
    %p284 = por %p282, %p283
    %p285 = scmp.ne.s32.totalorder %s271, %s272
    %p286 = scmp.eq.s32.totalorder %s23, 1
    %p287 = por %p285, %p286
    %p289 = scmp.ne.s32.totalorder %s272, %s288
    %p290 = scmp.eq.s32.totalorder %s23, 0
    %p291 = por %p289, %p290
    %p292 = scmp.le.s32.totalorder 1, %s17
    %p293 = scmp.lt.s32.totalorder %s17, 3
    %p294 = pnand %p292, %p293
    %p295 = pneg %p294
    // Predicated region
    $region9: #{tpu_custom_call.1} parent=5 // pred_check
      _
    $region10: #{tpu_custom_call.1} parent=5 // pred_check_branch
      %297 = sbr.rel (%p294) target = $region12
    $region11: #{tpu_custom_call.1} parent=5 // pred_region
      %s298 = ssub.s32 %s17, 1
      // Predicated region
      $region13: #{tpu_custom_call.1} parent=11 // pred_check
        %p299 = pneg %p90
      $region14: #{tpu_custom_call.1} parent=11 // pred_check_branch
        %301 = sbr.rel (%p299) target = $region16
      $region15: #{tpu_custom_call.1} parent=11 // pred_region
        _
      $region16: #{tpu_custom_call.1} parent=11 // pred_fallthru
        _
      // Predicated region
      $region17: #{tpu_custom_call.1} parent=11 // pred_check
        %p302 = pneg %p111
      $region18: #{tpu_custom_call.1} parent=11 // pred_check_branch
        %304 = sbr.rel (%p302) target = $region20
      $region19: #{tpu_custom_call.1} parent=11 // pred_region
        _
      $region20: #{tpu_custom_call.1} parent=11 // pred_fallthru
        _
      // Predicated region
      $region21: #{tpu_custom_call.1} parent=11 // pred_check
        %p305 = pneg %p132
      $region22: #{tpu_custom_call.1} parent=11 // pred_check_branch
        %307 = sbr.rel (%p305) target = $region24
      $region23: #{tpu_custom_call.1} parent=11 // pred_region
        _
      $region24: #{tpu_custom_call.1} parent=11 // pred_fallthru
        _
      // Predicated region
      $region25: #{tpu_custom_call.1} parent=11 // pred_check
        %p308 = pneg %p153
      $region26: #{tpu_custom_call.1} parent=11 // pred_check_branch
        %310 = sbr.rel (%p308) target = $region28
      $region27: #{tpu_custom_call.1} parent=11 // pred_region
        _
      $region28: #{tpu_custom_call.1} parent=11 // pred_fallthru
        _
      // Predicated region
      $region29: #{tpu_custom_call.1} parent=11 // pred_check
        %p311 = pneg %p174
      $region30: #{tpu_custom_call.1} parent=11 // pred_check_branch
        %313 = sbr.rel (%p311) target = $region32
      $region31: #{tpu_custom_call.1} parent=11 // pred_region
        _
      $region32: #{tpu_custom_call.1} parent=11 // pred_fallthru
        _
      // Predicated region
      $region33: #{tpu_custom_call.1} parent=11 // pred_check
        %p314 = pneg %p195
      $region34: #{tpu_custom_call.1} parent=11 // pred_check_branch
        %316 = sbr.rel (%p314) target = $region36
      $region35: #{tpu_custom_call.1} parent=11 // pred_region
        _
      $region36: #{tpu_custom_call.1} parent=11 // pred_fallthru
        _
      // Predicated region
      $region37: #{tpu_custom_call.1} parent=11 // pred_check
        %p317 = pneg %p216
      $region38: #{tpu_custom_call.1} parent=11 // pred_check_branch
        %319 = sbr.rel (%p317) target = $region40
      $region39: #{tpu_custom_call.1} parent=11 // pred_region
        _
      $region40: #{tpu_custom_call.1} parent=11 // pred_fallthru
        _
      // Predicated region
      $region41: #{tpu_custom_call.1} parent=11 // pred_check
        %p320 = pneg %p237
      $region42: #{tpu_custom_call.1} parent=11 // pred_check_branch
        %322 = sbr.rel (%p320) target = $region44
      $region43: #{tpu_custom_call.1} parent=11 // pred_region
        _
      $region44: #{tpu_custom_call.1} parent=11 // pred_fallthru
        _
      // Predicated region
      $region45: #{tpu_custom_call.1} parent=11 // pred_check
        %p323 = pneg %p258
      $region46: #{tpu_custom_call.1} parent=11 // pred_check_branch
        %325 = sbr.rel (%p323) target = $region48
      $region47: #{tpu_custom_call.1} parent=11 // pred_region
        _
      $region48: #{tpu_custom_call.1} parent=11 // pred_fallthru
        _
    $region12: #{tpu_custom_call.1} parent=5 // pred_fallthru
      _
    %p326 = scmp.lt.s32.totalorder %s17, 2
    // Predicated region
    $region49: #{tpu_custom_call.1} parent=5 // pred_check
      %p327 = pneg %p326
    $region50: #{tpu_custom_call.1} parent=5 // pred_check_branch
      %329 = sbr.rel (%p327) target = $region52
    $region51: #{tpu_custom_call.1} parent=5 // pred_region
      // Predicated region
      $region53: #{tpu_custom_call.1} parent=51 // pred_check
        %p330 = pneg %p37
      $region54: #{tpu_custom_call.1} parent=51 // pred_check_branch
        %332 = sbr.rel (%p330) target = $region56
      $region55: #{tpu_custom_call.1} parent=51 // pred_region
        %p333 = scmp.lt.s32.totalorder %s17, 1
        %s334 = scalar_select %p333, %s17, 1
        %s335 = smul.addr %s334, 2
        %s336 = smul.addr %s335, 4
        %s337 = scalar_lea.vmem %s0, %s336
      $region56: #{tpu_custom_call.1} parent=51 // pred_fallthru
        _
      // Predicated region
      $region57: #{tpu_custom_call.1} parent=51 // pred_check
        %p338 = pneg %p63
      $region58: #{tpu_custom_call.1} parent=51 // pred_check_branch
        %340 = sbr.rel (%p338) target = $region60
      $region59: #{tpu_custom_call.1} parent=51 // pred_region
        %p341 = scmp.lt.s32.totalorder %s17, 1
        %s342 = scalar_select %p341, %s17, 1
        %s343 = smul.addr %s342, 2
        %s344 = smul.addr %s343, 4
        %s345 = scalar_lea.vmem %s1, %s344
      $region60: #{tpu_custom_call.1} parent=51 // pred_fallthru
        _
    $region52: #{tpu_custom_call.1} parent=5 // pred_fallthru
      _
    %p346 = scmp.le.s32.totalorder 1, %s17
    %p347 = scmp.lt.s32.totalorder %s17, 3
    %p348 = pnand %p346, %p347
    %p349 = pneg %p348
    // Predicated region
    $region61: #{tpu_custom_call.1} parent=5 // pred_check
      _
    $region62: #{tpu_custom_call.1} parent=5 // pred_check_branch
      %351 = sbr.rel (%p348) target = $region64
    $region63: #{tpu_custom_call.1} parent=5 // pred_region
      %s352 = ssub.s32 %s17, 1
      %p353 = scmp.lt.s32.totalorder %s22, 1
      %s354 = scalar_select %p353, %s22, 1
      %s355 = smul.addr %s354, 2
      %s356 = smul.addr %s355, 4
      %s357 = scalar_lea.vmem %s0, %s356
      %p358 = pneg %p43
      %p359 = pneg %p40
      %p360 = scmp.lt.s32.totalorder %s22, 1
      %s361 = scalar_select %p360, %s22, 1
      %s362 = smul.addr %s361, 2
      %s363 = smul.addr %s362, 4
      %s364 = scalar_lea.vmem %s1, %s363
      %p365 = pneg %p69
      %p366 = pneg %p66
      %p367 = pneg %p90
      %p368 = pneg %p87
      %p369 = pneg %p111
      %p370 = pneg %p108
      %p371 = pneg %p132
      %p372 = pneg %p129
      %p373 = pneg %p153
      %p374 = pneg %p150
      %p375 = pneg %p174
      %p376 = pneg %p171
      %p377 = pneg %p195
      %p378 = pneg %p192
      %p379 = pneg %p216
      %p380 = pneg %p213
      %p381 = pneg %p237
      %p382 = pneg %p234
      %p383 = pneg %p258
      %p384 = pneg %p255
      %p385 = pneg %p284
      %p386 = pneg %p281
      %p387 = scmp.lt.s32.totalorder %s22, 1
      %s388 = scalar_select %p387, %s22, 1
      %s389 = smul.addr %s388, 2
      %s390 = smul.addr %s389, 8
      %s391 = scalar_lea.vmem %s11, %s390
      %p392 = scmp.lt.s32.totalorder %s22, 1
      %s393 = scalar_select %p392, %s22, 1
      %s394 = smul.addr %s393, 2
      %s395 = smul.addr %s394, 4
      %s396 = scalar_lea.vmem %s0, %s395
      %p397 = scmp.lt.s32.totalorder %s22, 1
      %s398 = scalar_select %p397, %s22, 1
      %s399 = smul.addr %s398, 2
      %s400 = smul.addr %s399, 4
      %s401 = scalar_lea.vmem %s1, %s400
      %p402 = scmp.lt.s32.totalorder %s22, 1
      %s403 = scalar_select %p402, %s22, 1
      %s404 = smul.addr %s403, 2
      %s405 = smul.addr %s404, 8
      %s406 = scalar_lea.vmem %s11, %s405
      %v407 = vld [vmem:[%s10] ss:$4 sm:$0x3]
      %s408 = scalar_lea.vmem %s10, 1
      %v409 = vld [vmem:[%s408] ss:$4 sm:$0x3]
      %s410 = scalar_lea.vmem %s10, 2
      %v411 = vld [vmem:[%s410] ss:$4 sm:$0x3]
      %s412 = scalar_lea.vmem %s10, 3
      %v413 = vld [vmem:[%s412] ss:$4 sm:$0x3]
      %v414 = vld [vmem:[%s396] sm:$0x77]
      %v415 = vld [vmem:[%s2] sm:$0x7]
      %v417 = vcombine.high %v414, %v414
      %419 = vrot.lane.b32.xlu0 %v414, 1
      %v420 = vpop.permute.xlu0 %419
      %421 = vrot.lane.b32.xlu0 %v417, 1
      %v422 = vpop.permute.xlu0 %421
      %v423 = vlaneseq
      %v424 = vand.u32 %v423, 127
      %vm425 = vcmp.lt.s32.totalorder %v424, 1
      %v426 = vsel %vm425, %v420, %v422
      %v427 = vsel %vm425, %v422, %v420
      %v429 = vlaneseq
      %v430 = vshrl.u32 %v429, 7
      %v431 = vsub.s32 0, %v430
      %v432 = vrot.slane %v407, %v431
      %v433 = vlaneseq
      %v434 = vshrl.u32 %v433, 7
      %v435 = vsub.s32 1, %v434
      %v436 = vrot.slane %v407, %v435
      %v439 = vmul.f32 %v427, %v432
      %v440 = vmul.f32 %v426, %v436
      %441 = vrot.lane.b32.xlu0 %v414, 127
      %v442 = vpop.permute.xlu0 %441
      %443 = vrot.lane.b32.xlu0 %v417, 127
      %v444 = vpop.permute.xlu0 %443
      %vm445 = vcmp.lt.s32.totalorder %v424, 127
      %v446 = vsel %vm445, %v442, %v444
      %v447 = vsel %vm445, %v444, %v442
      %v449 = vlaneseq
      %v450 = vshrl.u32 %v449, 7
      %v451 = vsub.s32 0, %v450
      %v452 = vrot.slane %v409, %v451
      %v453 = vlaneseq
      %v454 = vshrl.u32 %v453, 7
      %v455 = vsub.s32 1, %v454
      %v456 = vrot.slane %v409, %v455
      %v459 = vmul.f32 %v446, %v452
      %v460 = vmul.f32 %v447, %v456
      %462 = vset.pattern.permute.xlu0 0
      %463 = vperm.xlu0 %462, %v415
      %v464 = vpop.permute.xlu0 %463
      %v466 = vmul.f32 %v439, %v464
      %v467 = vmul.f32 %v440, %v464
      %468 = vset.pattern.permute.xlu0 1
      %469 = vperm.xlu0 %468, %v415
      %v470 = vpop.permute.xlu0 %469
      %v472 = vunpack.c.l.s4 839922192
      %v473 = vunpack.c.0.s8 %v472
      %v474 = vlaneseq
      %v475 = vshrl.u32 %v474, 7
      %v476 = vsub.s32 %v473, %v475
      %v477 = vrot.slane %v470, %v476
      %v479 = vmul.f32 %v414, %v477
      %v481 = vcombine.high %v479, %v479
      %v483 = vadd.f32 %v466, %v479
      %v484 = vadd.f32 %v467, %v481
      %485 = vset.pattern.permute.xlu0 2
      %486 = vperm.xlu0 %485, %v415
      %v487 = vpop.permute.xlu0 %486
      %v489 = vmul.f32 %v459, %v487
      %v490 = vmul.f32 %v460, %v487
      %v491 = vadd.f32 %v483, %v489
      %v492 = vadd.f32 %v484, %v490
      %493 = vset.pattern.permute.xlu0 3
      %494 = vperm.xlu0 %493, %v415
      %v495 = vpop.permute.xlu0 %494
      %v497 = vmul.f32 %v439, %v495
      %v498 = vmul.f32 %v440, %v495
      %499 = vset.pattern.permute.xlu0 4
      %500 = vperm.xlu0 %499, %v415
      %v501 = vpop.permute.xlu0 %500
      %v503 = vunpack.c.l.s4 839922192
      %v504 = vunpack.c.0.s8 %v503
      %v505 = vlaneseq
      %v506 = vshrl.u32 %v505, 7
      %v507 = vsub.s32 %v504, %v506
      %v508 = vrot.slane %v501, %v507
      %v510 = vmul.f32 %v414, %v508
      %v512 = vcombine.high %v510, %v510
      %v514 = vadd.f32 %v497, %v510
      %v515 = vadd.f32 %v498, %v512
      %516 = vset.pattern.permute.xlu0 5
      %517 = vperm.xlu0 %516, %v415
      %v518 = vpop.permute.xlu0 %517
      %v520 = vmul.f32 %v459, %v518
      %v521 = vmul.f32 %v460, %v518
      %v522 = vadd.f32 %v514, %v520
      %v523 = vadd.f32 %v515, %v521
      %524 = vset.pattern.permute.xlu0 6
      %525 = vperm.xlu0 %524, %v415
      %v526 = vpop.permute.xlu0 %525
      %v528 = vmul.f32 %v439, %v526
      %v529 = vmul.f32 %v440, %v526
      %530 = vset.pattern.permute.xlu0 7
      %531 = vperm.xlu0 %530, %v415
      %v532 = vpop.permute.xlu0 %531
      %v534 = vunpack.c.l.s4 839922192
      %v535 = vunpack.c.0.s8 %v534
      %v536 = vlaneseq
      %v537 = vshrl.u32 %v536, 7
      %v538 = vsub.s32 %v535, %v537
      %v539 = vrot.slane %v532, %v538
      %v541 = vmul.f32 %v414, %v539
      %v543 = vcombine.high %v541, %v541
      %v545 = vadd.f32 %v528, %v541
      %v546 = vadd.f32 %v529, %v543
      %547 = vset.pattern.permute.xlu0 8
      %548 = vperm.xlu0 %547, %v415
      %v549 = vpop.permute.xlu0 %548
      %v551 = vmul.f32 %v459, %v549
      %v552 = vmul.f32 %v460, %v549
      %v553 = vadd.f32 %v545, %v551
      %v554 = vadd.f32 %v546, %v552
      %555 = vrot.lane.b32.xlu0 %v491, 16
      %v556 = vpop.permute.xlu0 %555
      %557 = vrot.lane.b32.xlu0 %v492, 16
      %v558 = vpop.permute.xlu0 %557
      %vm559 = vcmp.lt.s32.totalorder %v424, 16
      %v560 = vsel %vm559, %v556, %v558
      %v561 = vsel %vm559, %v558, %v556
      %v563 = vlaneseq
      %v564 = vshrl.u32 %v563, 7
      %v565 = vsub.s32 0, %v564
      %v566 = vrot.slane %v411, %v565
      %v567 = vlaneseq
      %v568 = vshrl.u32 %v567, 7
      %v569 = vsub.s32 1, %v568
      %v570 = vrot.slane %v411, %v569
      %v573 = vmul.f32 %v566, %v561
      %v574 = vmul.f32 %v570, %v560
      %v575 = vadd.f32 %v522, %v573
      %v576 = vadd.f32 %v523, %v574
      %577 = vrot.lane.b32.xlu0 %v553, 112
      %v578 = vpop.permute.xlu0 %577
      %579 = vrot.lane.b32.xlu0 %v554, 112
      %v580 = vpop.permute.xlu0 %579
      %vm581 = vcmp.lt.s32.totalorder %v424, 112
      %v582 = vsel %vm581, %v578, %v580
      %v583 = vsel %vm581, %v580, %v578
      %v585 = vlaneseq
      %v586 = vshrl.u32 %v585, 7
      %v587 = vsub.s32 0, %v586
      %v588 = vrot.slane %v413, %v587
      %v589 = vlaneseq
      %v590 = vshrl.u32 %v589, 7
      %v591 = vsub.s32 1, %v590
      %v592 = vrot.slane %v413, %v591
      %v595 = vmul.f32 %v588, %v582
      %v596 = vmul.f32 %v592, %v583
      %v597 = vadd.f32 %v575, %v595
      %v598 = vadd.f32 %v576, %v596
      %v599 = vmul.f32 %v597, %v597
      %v600 = vmul.f32 %v598, %v598
      %v601 = vmul.f32 %v597, %v599
      %v602 = vmul.f32 %v598, %v600
      %v603 = vmul.f32 %v601, 0.044715
      %v604 = vmul.f32 %v602, 0.044715
      %v605 = vadd.f32 %v597, %v603
      %v606 = vadd.f32 %v598, %v604
      %v607 = vmul.f32 %v605, 0.7978846
      %v608 = vmul.f32 %v606, 0.7978846
      %v609 = vtanh.pop %v607
      %v610 = vtanh.pop %v608
      %v611 = vadd.f32 %v609, 1.0
      %v612 = vadd.f32 %v610, 1.0
      %v613 = vmul.f32 %v611, 0.5
      %v614 = vmul.f32 %v612, 0.5
      %v615 = vmul.f32 %v597, %v613
      %v616 = vmul.f32 %v598, %v614
      %v617 = vld [vmem:[%s3] sm:$0x7]
      %vm618 = vcmask 23552
      %v620 = vsel %vm618, %v617, 0
      %vm622 = vcmask 1042432
      %v624 = vsel %vm622, %v615, 0
      %v627 = vsel %vm622, %v616, 0
      %629 = vmatprep.subr.mxu0 %v627
      %630 = vmatpush1.msra.mxu0 %v624
      %631 = vmatprep.subr.mxu0 0.0
      %632 = vmatpush1.msra.mxu0 0.0
      %633 = vmatprep.subr.mxu0 0.0
      %634 = vmatpush1.msra.mxu0 0.0
      %635 = vmatprep.subr.mxu0 0.0
      %636 = vmatpush1.msra.mxu0 0.0
      %637 = vmatprep.subr.mxu0 0.0
      %638 = vmatpush1.msra.mxu0 0.0
      %639 = vmatprep.subr.mxu0 0.0
      %640 = vmatpush1.msra.mxu0 0.0
      %641 = vmatprep.subr.mxu0 0.0
      %642 = vmatpush1.msra.mxu0 0.0
      %643 = vmatprep.subr.mxu0 0.0
      %644 = vmatpush1.msra.mxu0 0.0
      %645 = vmatprep.subr.mxu0 0.0
      %646 = vmatpush1.msra.mxu0 0.0
      %647 = vmatprep.subr.mxu0 0.0
      %648 = vmatpush1.msra.mxu0 0.0
      %649 = vmatprep.subr.mxu0 0.0
      %650 = vmatpush1.msra.mxu0 0.0
      %651 = vmatprep.subr.mxu0 0.0
      %652 = vmatpush1.msra.mxu0 0.0
      %653 = vmatprep.subr.mxu0 0.0
      %654 = vmatpush1.msra.mxu0 0.0
      %655 = vmatprep.subr.mxu0 0.0
      %656 = vmatpush1.msra.mxu0 0.0
      %657 = vmatprep.subr.mxu0 0.0
      %658 = vmatpush1.msra.mxu0 0.0
      %659 = vmatprep.subr.mxu0 0.0
      %660 = vmatpush1.msra.mxu0 0.0
      %661 = vmatprep.subr.mxu0 0.0
      %662 = vmatpush1.msra.mxu0 0.0
      %663 = vmatprep.subr.mxu0 0.0
      %664 = vmatpush1.msra.mxu0 0.0
      %665 = vmatprep.subr.mxu0 0.0
      %666 = vmatpush1.msra.mxu0 0.0
      %667 = vmatprep.subr.mxu0 0.0
      %668 = vmatpush1.msra.mxu0 0.0
      %669 = vmatprep.subr.mxu0 0.0
      %670 = vmatpush1.msra.mxu0 0.0
      %671 = vmatprep.subr.mxu0 0.0
      %672 = vmatpush1.msra.mxu0 0.0
      %673 = vmatprep.subr.mxu0 0.0
      %674 = vmatpush1.msra.mxu0 0.0
      %675 = vmatprep.subr.mxu0 0.0
      %676 = vmatpush1.msra.mxu0 0.0
      %677 = vmatprep.subr.mxu0 0.0
      %678 = vmatpush1.msra.mxu0 0.0
      %679 = vmatprep.subr.mxu0 0.0
      %680 = vmatpush1.msra.mxu0 0.0
      %681 = vmatprep.subr.mxu0 0.0
      %682 = vmatpush1.msra.mxu0 0.0
      %683 = vmatprep.subr.mxu0 0.0
      %684 = vmatpush1.msra.mxu0 0.0
      %685 = vmatprep.subr.mxu0 0.0
      %686 = vmatpush1.msra.mxu0 0.0
      %687 = vmatprep.subr.mxu0 0.0
      %688 = vmatpush1.msra.mxu0 0.0
      %689 = vmatprep.subr.mxu0 0.0
      %690 = vmatpush1.msra.mxu0 0.0
      %691 = vmatprep.subr.mxu0 0.0
      %692 = vmatpush1.msra.mxu0 0.0
      %693 = vmatprep.mubr.f32.mxu0 0.0
      %694 = vmatmul.mubr.f32.gmra.mrb[0].mxu0 %v620
      %v695 = vpop.f32.mrb[0].mxu0
      %v696 = vadd.f32 0.0, %v695
      %v697 = vpop.f32.mrb[0].mxu0
      %v698 = vadd.f32 0.0, %v697
      %699 = vdwg.mxu0
      %v700 = vmul.f32 %v696, %v696
      %v701 = vmul.f32 %v698, %v698
      %v702 = vmul.f32 %v696, %v700
      %v703 = vmul.f32 %v698, %v701
      %v704 = vmul.f32 %v702, 0.044715
      %v705 = vmul.f32 %v703, 0.044715
      %v706 = vadd.f32 %v696, %v704
      %v707 = vadd.f32 %v698, %v705
      %v708 = vmul.f32 %v706, 0.7978846
      %v709 = vmul.f32 %v707, 0.7978846
      %v710 = vtanh.pop %v708
      %v711 = vtanh.pop %v709
      %v712 = vadd.f32 %v710, 1.0
      %v713 = vadd.f32 %v711, 1.0
      %v714 = vmul.f32 %v712, 0.5
      %v715 = vmul.f32 %v713, 0.5
      %v716 = vmul.f32 %v696, %v714
      %v717 = vmul.f32 %v698, %v715
      %s718 = scalar_lea.vmem %s2, 4
      %v719 = vld [vmem:[%s718] sm:$0x7]
      %720 = vrot.lane.b32.xlu0 %v716, 1
      %v721 = vpop.permute.xlu0 %720
      %722 = vrot.lane.b32.xlu0 %v717, 1
      %v723 = vpop.permute.xlu0 %722
      %v724 = vsel %vm425, %v721, %v723
      %v725 = vsel %vm425, %v723, %v721
      %v726 = vmul.f32 %v725, %v432
      %v727 = vmul.f32 %v724, %v436
      %728 = vrot.lane.b32.xlu0 %v716, 127
      %v729 = vpop.permute.xlu0 %728
      %730 = vrot.lane.b32.xlu0 %v717, 127
      %v731 = vpop.permute.xlu0 %730
      %v732 = vsel %vm445, %v729, %v731
      %v733 = vsel %vm445, %v731, %v729
      %v734 = vmul.f32 %v732, %v452
      %v735 = vmul.f32 %v733, %v456
      %737 = vset.pattern.permute.xlu0 0
      %738 = vperm.xlu0 %737, %v719
      %v739 = vpop.permute.xlu0 %738
      %v741 = vmul.f32 %v726, %v739
      %v742 = vmul.f32 %v727, %v739
      %743 = vset.pattern.permute.xlu0 1
      %744 = vperm.xlu0 %743, %v719
      %v745 = vpop.permute.xlu0 %744
      %v747 = vmul.f32 %v716, %v745
      %v748 = vmul.f32 %v717, %v745
      %v749 = vadd.f32 %v741, %v747
      %v750 = vadd.f32 %v742, %v748
      %751 = vset.pattern.permute.xlu0 2
      %752 = vperm.xlu0 %751, %v719
      %v753 = vpop.permute.xlu0 %752
      %v755 = vmul.f32 %v734, %v753
      %v756 = vmul.f32 %v735, %v753
      %v757 = vadd.f32 %v749, %v755
      %v758 = vadd.f32 %v750, %v756
      %759 = vset.pattern.permute.xlu0 3
      %760 = vperm.xlu0 %759, %v719
      %v761 = vpop.permute.xlu0 %760
      %v763 = vmul.f32 %v726, %v761
      %v764 = vmul.f32 %v727, %v761
      %765 = vset.pattern.permute.xlu0 4
      %766 = vperm.xlu0 %765, %v719
      %v767 = vpop.permute.xlu0 %766
      %v769 = vmul.f32 %v716, %v767
      %v770 = vmul.f32 %v717, %v767
      %v771 = vadd.f32 %v763, %v769
      %v772 = vadd.f32 %v764, %v770
      %773 = vset.pattern.permute.xlu0 5
      %774 = vperm.xlu0 %773, %v719
      %v775 = vpop.permute.xlu0 %774
      %v777 = vmul.f32 %v734, %v775
      %v778 = vmul.f32 %v735, %v775
      %v779 = vadd.f32 %v771, %v777
      %v780 = vadd.f32 %v772, %v778
      %781 = vset.pattern.permute.xlu0 6
      %782 = vperm.xlu0 %781, %v719
      %v783 = vpop.permute.xlu0 %782
      %v785 = vmul.f32 %v726, %v783
      %v786 = vmul.f32 %v727, %v783
      %787 = vset.pattern.permute.xlu0 7
      %788 = vperm.xlu0 %787, %v719
      %v789 = vpop.permute.xlu0 %788
      %v791 = vmul.f32 %v716, %v789
      %v792 = vmul.f32 %v717, %v789
      %v793 = vadd.f32 %v785, %v791
      %v794 = vadd.f32 %v786, %v792
      %795 = vset.pattern.permute.xlu0 8
      %796 = vperm.xlu0 %795, %v719
      %v797 = vpop.permute.xlu0 %796
      %v799 = vmul.f32 %v734, %v797
      %v800 = vmul.f32 %v735, %v797
      %v801 = vadd.f32 %v793, %v799
      %v802 = vadd.f32 %v794, %v800
      %803 = vrot.lane.b32.xlu0 %v757, 16
      %v804 = vpop.permute.xlu0 %803
      %805 = vrot.lane.b32.xlu0 %v758, 16
      %v806 = vpop.permute.xlu0 %805
      %v807 = vsel %vm559, %v804, %v806
      %v808 = vsel %vm559, %v806, %v804
      %v809 = vmul.f32 %v566, %v808
      %v810 = vmul.f32 %v570, %v807
      %v811 = vadd.f32 %v779, %v809
      %v812 = vadd.f32 %v780, %v810
      %813 = vrot.lane.b32.xlu0 %v801, 112
      %v814 = vpop.permute.xlu0 %813
      %815 = vrot.lane.b32.xlu0 %v802, 112
      %v816 = vpop.permute.xlu0 %815
      %v817 = vsel %vm581, %v814, %v816
      %v818 = vsel %vm581, %v816, %v814
      %v819 = vmul.f32 %v588, %v817
      %v820 = vmul.f32 %v592, %v818
      %v821 = vadd.f32 %v811, %v819
      %v822 = vadd.f32 %v812, %v820
      %v823 = vmul.f32 %v821, %v821
      %v824 = vmul.f32 %v822, %v822
      %v825 = vmul.f32 %v821, %v823
      %v826 = vmul.f32 %v822, %v824
      %v827 = vmul.f32 %v825, 0.044715
      %v828 = vmul.f32 %v826, 0.044715
      %v829 = vadd.f32 %v821, %v827
      %v830 = vadd.f32 %v822, %v828
      %v831 = vmul.f32 %v829, 0.7978846
      %v832 = vmul.f32 %v830, 0.7978846
      %v833 = vtanh.pop %v831
      %v834 = vtanh.pop %v832
      %v835 = vadd.f32 %v833, 1.0
      %v836 = vadd.f32 %v834, 1.0
      %v837 = vmul.f32 %v835, 0.5
      %v838 = vmul.f32 %v836, 0.5
      %v839 = vmul.f32 %v821, %v837
      %v840 = vmul.f32 %v822, %v838
      %s841 = scalar_lea.vmem %s3, 4
      %v842 = vld [vmem:[%s841] sm:$0x7]
      %v844 = vsel %vm618, %v842, 0
      %v847 = vsel %vm622, %v839, 0
      %v850 = vsel %vm622, %v840, 0
      %852 = vmatprep.subr.mxu0 %v850
      %853 = vmatpush1.msra.mxu0 %v847
      %854 = vmatprep.subr.mxu0 0.0
      %855 = vmatpush1.msra.mxu0 0.0
      %856 = vmatprep.subr.mxu0 0.0
      %857 = vmatpush1.msra.mxu0 0.0
      %858 = vmatprep.subr.mxu0 0.0
      %859 = vmatpush1.msra.mxu0 0.0
      %860 = vmatprep.subr.mxu0 0.0
      %861 = vmatpush1.msra.mxu0 0.0
      %862 = vmatprep.subr.mxu0 0.0
      %863 = vmatpush1.msra.mxu0 0.0
      %864 = vmatprep.subr.mxu0 0.0
      %865 = vmatpush1.msra.mxu0 0.0
      %866 = vmatprep.subr.mxu0 0.0
      %867 = vmatpush1.msra.mxu0 0.0
      %868 = vmatprep.subr.mxu0 0.0
      %869 = vmatpush1.msra.mxu0 0.0
      %870 = vmatprep.subr.mxu0 0.0
      %871 = vmatpush1.msra.mxu0 0.0
      %872 = vmatprep.subr.mxu0 0.0
      %873 = vmatpush1.msra.mxu0 0.0
      %874 = vmatprep.subr.mxu0 0.0
      %875 = vmatpush1.msra.mxu0 0.0
      %876 = vmatprep.subr.mxu0 0.0
      %877 = vmatpush1.msra.mxu0 0.0
      %878 = vmatprep.subr.mxu0 0.0
      %879 = vmatpush1.msra.mxu0 0.0
      %880 = vmatprep.subr.mxu0 0.0
      %881 = vmatpush1.msra.mxu0 0.0
      %882 = vmatprep.subr.mxu0 0.0
      %883 = vmatpush1.msra.mxu0 0.0
      %884 = vmatprep.subr.mxu0 0.0
      %885 = vmatpush1.msra.mxu0 0.0
      %886 = vmatprep.subr.mxu0 0.0
      %887 = vmatpush1.msra.mxu0 0.0
      %888 = vmatprep.subr.mxu0 0.0
      %889 = vmatpush1.msra.mxu0 0.0
      %890 = vmatprep.subr.mxu0 0.0
      %891 = vmatpush1.msra.mxu0 0.0
      %892 = vmatprep.subr.mxu0 0.0
      %893 = vmatpush1.msra.mxu0 0.0
      %894 = vmatprep.subr.mxu0 0.0
      %895 = vmatpush1.msra.mxu0 0.0
      %896 = vmatprep.subr.mxu0 0.0
      %897 = vmatpush1.msra.mxu0 0.0
      %898 = vmatprep.subr.mxu0 0.0
      %899 = vmatpush1.msra.mxu0 0.0
      %900 = vmatprep.subr.mxu0 0.0
      %901 = vmatpush1.msra.mxu0 0.0
      %902 = vmatprep.subr.mxu0 0.0
      %903 = vmatpush1.msra.mxu0 0.0
      %904 = vmatprep.subr.mxu0 0.0
      %905 = vmatpush1.msra.mxu0 0.0
      %906 = vmatprep.subr.mxu0 0.0
      %907 = vmatpush1.msra.mxu0 0.0
      %908 = vmatprep.subr.mxu0 0.0
      %909 = vmatpush1.msra.mxu0 0.0
      %910 = vmatprep.subr.mxu0 0.0
      %911 = vmatpush1.msra.mxu0 0.0
      %912 = vmatprep.subr.mxu0 0.0
      %913 = vmatpush1.msra.mxu0 0.0
      %914 = vmatprep.subr.mxu0 0.0
      %915 = vmatpush1.msra.mxu0 0.0
      %916 = vmatprep.mubr.f32.mxu0 0.0
      %917 = vmatmul.mubr.f32.gmra.mrb[0].mxu0 %v844
      %v918 = vpop.f32.mrb[0].mxu0
      %v919 = vadd.f32 0.0, %v918
      %v920 = vpop.f32.mrb[0].mxu0
      %v921 = vadd.f32 0.0, %v920
      %922 = vdwg.mxu0
      %v923 = vmul.f32 %v919, %v919
      %v924 = vmul.f32 %v921, %v921
      %v925 = vmul.f32 %v919, %v923
      %v926 = vmul.f32 %v921, %v924
      %v927 = vmul.f32 %v925, 0.044715
      %v928 = vmul.f32 %v926, 0.044715
      %v929 = vadd.f32 %v919, %v927
      %v930 = vadd.f32 %v921, %v928
      %v931 = vmul.f32 %v929, 0.7978846
      %v932 = vmul.f32 %v930, 0.7978846
      %v933 = vtanh.pop %v931
      %v934 = vtanh.pop %v932
      %v935 = vadd.f32 %v933, 1.0
      %v936 = vadd.f32 %v934, 1.0
      %v937 = vmul.f32 %v935, 0.5
      %v938 = vmul.f32 %v936, 0.5
      %v939 = vmul.f32 %v919, %v937
      %v940 = vmul.f32 %v921, %v938
      %s941 = scalar_lea.vmem %s2, 8
      %v942 = vld [vmem:[%s941] sm:$0x7]
      %943 = vrot.lane.b32.xlu0 %v939, 1
      %v944 = vpop.permute.xlu0 %943
      %945 = vrot.lane.b32.xlu0 %v940, 1
      %v946 = vpop.permute.xlu0 %945
      %v947 = vsel %vm425, %v944, %v946
      %v948 = vsel %vm425, %v946, %v944
      %v949 = vmul.f32 %v948, %v432
      %v950 = vmul.f32 %v947, %v436
      %951 = vrot.lane.b32.xlu0 %v939, 127
      %v952 = vpop.permute.xlu0 %951
      %953 = vrot.lane.b32.xlu0 %v940, 127
      %v954 = vpop.permute.xlu0 %953
      %v955 = vsel %vm445, %v952, %v954
      %v956 = vsel %vm445, %v954, %v952
      %v957 = vmul.f32 %v955, %v452
      %v958 = vmul.f32 %v956, %v456
      %960 = vset.pattern.permute.xlu0 0
      %961 = vperm.xlu0 %960, %v942
      %v962 = vpop.permute.xlu0 %961
      %v964 = vmul.f32 %v949, %v962
      %v965 = vmul.f32 %v950, %v962
      %966 = vset.pattern.permute.xlu0 1
      %967 = vperm.xlu0 %966, %v942
      %v968 = vpop.permute.xlu0 %967
      %v970 = vmul.f32 %v939, %v968
      %v971 = vmul.f32 %v940, %v968
      %v972 = vadd.f32 %v964, %v970
      %v973 = vadd.f32 %v965, %v971
      %974 = vset.pattern.permute.xlu0 2
      %975 = vperm.xlu0 %974, %v942
      %v976 = vpop.permute.xlu0 %975
      %v978 = vmul.f32 %v957, %v976
      %v979 = vmul.f32 %v958, %v976
      %v980 = vadd.f32 %v972, %v978
      %v981 = vadd.f32 %v973, %v979
      %982 = vset.pattern.permute.xlu0 3
      %983 = vperm.xlu0 %982, %v942
      %v984 = vpop.permute.xlu0 %983
      %v986 = vmul.f32 %v949, %v984
      %v987 = vmul.f32 %v950, %v984
      %988 = vset.pattern.permute.xlu0 4
      %989 = vperm.xlu0 %988, %v942
      %v990 = vpop.permute.xlu0 %989
      %v992 = vmul.f32 %v939, %v990
      %v993 = vmul.f32 %v940, %v990
      %v994 = vadd.f32 %v986, %v992
      %v995 = vadd.f32 %v987, %v993
      %996 = vset.pattern.permute.xlu0 5
      %997 = vperm.xlu0 %996, %v942
      %v998 = vpop.permute.xlu0 %997
      %v1000 = vmul.f32 %v957, %v998
      %v1001 = vmul.f32 %v958, %v998
      %v1002 = vadd.f32 %v994, %v1000
      %v1003 = vadd.f32 %v995, %v1001
      %1004 = vset.pattern.permute.xlu0 6
      %1005 = vperm.xlu0 %1004, %v942
      %v1006 = vpop.permute.xlu0 %1005
      %v1008 = vmul.f32 %v949, %v1006
      %v1009 = vmul.f32 %v950, %v1006
      %1010 = vset.pattern.permute.xlu0 7
      %1011 = vperm.xlu0 %1010, %v942
      %v1012 = vpop.permute.xlu0 %1011
      %v1014 = vmul.f32 %v939, %v1012
      %v1015 = vmul.f32 %v940, %v1012
      %v1016 = vadd.f32 %v1008, %v1014
      %v1017 = vadd.f32 %v1009, %v1015
      %1018 = vset.pattern.permute.xlu0 8
      %1019 = vperm.xlu0 %1018, %v942
      %v1020 = vpop.permute.xlu0 %1019
      %v1022 = vmul.f32 %v957, %v1020
      %v1023 = vmul.f32 %v958, %v1020
      %v1024 = vadd.f32 %v1016, %v1022
      %v1025 = vadd.f32 %v1017, %v1023
      %1026 = vrot.lane.b32.xlu0 %v980, 16
      %v1027 = vpop.permute.xlu0 %1026
      %1028 = vrot.lane.b32.xlu0 %v981, 16
      %v1029 = vpop.permute.xlu0 %1028
      %v1030 = vsel %vm559, %v1027, %v1029
      %v1031 = vsel %vm559, %v1029, %v1027
      %v1032 = vmul.f32 %v566, %v1031
      %v1033 = vmul.f32 %v570, %v1030
      %v1034 = vadd.f32 %v1002, %v1032
      %v1035 = vadd.f32 %v1003, %v1033
      %1036 = vrot.lane.b32.xlu0 %v1024, 112
      %v1037 = vpop.permute.xlu0 %1036
      %1038 = vrot.lane.b32.xlu0 %v1025, 112
      %v1039 = vpop.permute.xlu0 %1038
      %v1040 = vsel %vm581, %v1037, %v1039
      %v1041 = vsel %vm581, %v1039, %v1037
      %v1042 = vmul.f32 %v588, %v1040
      %v1043 = vmul.f32 %v592, %v1041
      %v1044 = vadd.f32 %v1034, %v1042
      %v1045 = vadd.f32 %v1035, %v1043
      %v1046 = vmul.f32 %v1044, %v1044
      %v1047 = vmul.f32 %v1045, %v1045
      %v1048 = vmul.f32 %v1044, %v1046
      %v1049 = vmul.f32 %v1045, %v1047
      %v1050 = vmul.f32 %v1048, 0.044715
      %v1051 = vmul.f32 %v1049, 0.044715
      %v1052 = vadd.f32 %v1044, %v1050
      %v1053 = vadd.f32 %v1045, %v1051
      %v1054 = vmul.f32 %v1052, 0.7978846
      %v1055 = vmul.f32 %v1053, 0.7978846
      %v1056 = vtanh.pop %v1054
      %v1057 = vtanh.pop %v1055
      %v1058 = vadd.f32 %v1056, 1.0
      %v1059 = vadd.f32 %v1057, 1.0
      %v1060 = vmul.f32 %v1058, 0.5
      %v1061 = vmul.f32 %v1059, 0.5
      %v1062 = vmul.f32 %v1044, %v1060
      %v1063 = vmul.f32 %v1045, %v1061
      %s1064 = scalar_lea.vmem %s3, 8
      %v1065 = vld [vmem:[%s1064] sm:$0x7]
      %v1067 = vsel %vm618, %v1065, 0
      %v1070 = vsel %vm622, %v1062, 0
      %v1073 = vsel %vm622, %v1063, 0
      %1075 = vmatprep.subr.mxu0 %v1073
      %1076 = vmatpush1.msra.mxu0 %v1070
      %1077 = vmatprep.subr.mxu0 0.0
      %1078 = vmatpush1.msra.mxu0 0.0
      %1079 = vmatprep.subr.mxu0 0.0
      %1080 = vmatpush1.msra.mxu0 0.0
      %1081 = vmatprep.subr.mxu0 0.0
      %1082 = vmatpush1.msra.mxu0 0.0
      %1083 = vmatprep.subr.mxu0 0.0
      %1084 = vmatpush1.msra.mxu0 0.0
      %1085 = vmatprep.subr.mxu0 0.0
      %1086 = vmatpush1.msra.mxu0 0.0
      %1087 = vmatprep.subr.mxu0 0.0
      %1088 = vmatpush1.msra.mxu0 0.0
      %1089 = vmatprep.subr.mxu0 0.0
      %1090 = vmatpush1.msra.mxu0 0.0
      %1091 = vmatprep.subr.mxu0 0.0
      %1092 = vmatpush1.msra.mxu0 0.0
      %1093 = vmatprep.subr.mxu0 0.0
      %1094 = vmatpush1.msra.mxu0 0.0
      %1095 = vmatprep.subr.mxu0 0.0
      %1096 = vmatpush1.msra.mxu0 0.0
      %1097 = vmatprep.subr.mxu0 0.0
      %1098 = vmatpush1.msra.mxu0 0.0
      %1099 = vmatprep.subr.mxu0 0.0
      %1100 = vmatpush1.msra.mxu0 0.0
      %1101 = vmatprep.subr.mxu0 0.0
      %1102 = vmatpush1.msra.mxu0 0.0
      %1103 = vmatprep.subr.mxu0 0.0
      %1104 = vmatpush1.msra.mxu0 0.0
      %1105 = vmatprep.subr.mxu0 0.0
      %1106 = vmatpush1.msra.mxu0 0.0
      %1107 = vmatprep.subr.mxu0 0.0
      %1108 = vmatpush1.msra.mxu0 0.0
      %1109 = vmatprep.subr.mxu0 0.0
      %1110 = vmatpush1.msra.mxu0 0.0
      %1111 = vmatprep.subr.mxu0 0.0
      %1112 = vmatpush1.msra.mxu0 0.0
      %1113 = vmatprep.subr.mxu0 0.0
      %1114 = vmatpush1.msra.mxu0 0.0
      %1115 = vmatprep.subr.mxu0 0.0
      %1116 = vmatpush1.msra.mxu0 0.0
      %1117 = vmatprep.subr.mxu0 0.0
      %1118 = vmatpush1.msra.mxu0 0.0
      %1119 = vmatprep.subr.mxu0 0.0
      %1120 = vmatpush1.msra.mxu0 0.0
      %1121 = vmatprep.subr.mxu0 0.0
      %1122 = vmatpush1.msra.mxu0 0.0
      %1123 = vmatprep.subr.mxu0 0.0
      %1124 = vmatpush1.msra.mxu0 0.0
      %1125 = vmatprep.subr.mxu0 0.0
      %1126 = vmatpush1.msra.mxu0 0.0
      %1127 = vmatprep.subr.mxu0 0.0
      %1128 = vmatpush1.msra.mxu0 0.0
      %1129 = vmatprep.subr.mxu0 0.0
      %1130 = vmatpush1.msra.mxu0 0.0
      %1131 = vmatprep.subr.mxu0 0.0
      %1132 = vmatpush1.msra.mxu0 0.0
      %1133 = vmatprep.subr.mxu0 0.0
      %1134 = vmatpush1.msra.mxu0 0.0
      %1135 = vmatprep.subr.mxu0 0.0
      %1136 = vmatpush1.msra.mxu0 0.0
      %1137 = vmatprep.subr.mxu0 0.0
      %1138 = vmatpush1.msra.mxu0 0.0
      %1139 = vmatprep.mubr.f32.mxu0 0.0
      %1140 = vmatmul.mubr.f32.gmra.mrb[0].mxu0 %v1067
      %v1141 = vpop.f32.mrb[0].mxu0
      %v1142 = vadd.f32 0.0, %v1141
      %v1143 = vpop.f32.mrb[0].mxu0
      %v1144 = vadd.f32 0.0, %v1143
      %1145 = vdwg.mxu0
      %v1146 = vld [vmem:[%s401] sm:$0x77]
      %v1147 = vld [vmem:[%s4] sm:$0x7]
      %v1149 = vcombine.high %v1146, %v1146
      %1151 = vrot.lane.b32.xlu0 %v1146, 1
      %v1152 = vpop.permute.xlu0 %1151
      %1153 = vrot.lane.b32.xlu0 %v1149, 1
      %v1154 = vpop.permute.xlu0 %1153
      %v1155 = vsel %vm425, %v1152, %v1154
      %v1156 = vsel %vm425, %v1154, %v1152
      %v1157 = vmul.f32 %v1156, %v432
      %v1158 = vmul.f32 %v1155, %v436
      %1159 = vrot.lane.b32.xlu0 %v1146, 127
      %v1160 = vpop.permute.xlu0 %1159
      %1161 = vrot.lane.b32.xlu0 %v1149, 127
      %v1162 = vpop.permute.xlu0 %1161
      %v1163 = vsel %vm445, %v1160, %v1162
      %v1164 = vsel %vm445, %v1162, %v1160
      %v1165 = vmul.f32 %v1163, %v452
      %v1166 = vmul.f32 %v1164, %v456
      %1168 = vset.pattern.permute.xlu0 0
      %1169 = vperm.xlu0 %1168, %v1147
      %v1170 = vpop.permute.xlu0 %1169
      %v1172 = vmul.f32 %v1157, %v1170
      %v1173 = vmul.f32 %v1158, %v1170
      %1174 = vset.pattern.permute.xlu0 1
      %1175 = vperm.xlu0 %1174, %v1147
      %v1176 = vpop.permute.xlu0 %1175
      %v1178 = vunpack.c.l.s4 839922192
      %v1179 = vunpack.c.0.s8 %v1178
      %v1180 = vlaneseq
      %v1181 = vshrl.u32 %v1180, 7
      %v1182 = vsub.s32 %v1179, %v1181
      %v1183 = vrot.slane %v1176, %v1182
      %v1185 = vmul.f32 %v1146, %v1183
      %v1187 = vcombine.high %v1185, %v1185
      %v1189 = vadd.f32 %v1172, %v1185
      %v1190 = vadd.f32 %v1173, %v1187
      %1191 = vset.pattern.permute.xlu0 2
      %1192 = vperm.xlu0 %1191, %v1147
      %v1193 = vpop.permute.xlu0 %1192
      %v1195 = vmul.f32 %v1165, %v1193
      %v1196 = vmul.f32 %v1166, %v1193
      %v1197 = vadd.f32 %v1189, %v1195
      %v1198 = vadd.f32 %v1190, %v1196
      %1199 = vset.pattern.permute.xlu0 3
      %1200 = vperm.xlu0 %1199, %v1147
      %v1201 = vpop.permute.xlu0 %1200
      %v1203 = vmul.f32 %v1157, %v1201
      %v1204 = vmul.f32 %v1158, %v1201
      %1205 = vset.pattern.permute.xlu0 4
      %1206 = vperm.xlu0 %1205, %v1147
      %v1207 = vpop.permute.xlu0 %1206
      %v1209 = vunpack.c.l.s4 839922192
      %v1210 = vunpack.c.0.s8 %v1209
      %v1211 = vlaneseq
      %v1212 = vshrl.u32 %v1211, 7
      %v1213 = vsub.s32 %v1210, %v1212
      %v1214 = vrot.slane %v1207, %v1213
      %v1216 = vmul.f32 %v1146, %v1214
      %v1218 = vcombine.high %v1216, %v1216
      %v1220 = vadd.f32 %v1203, %v1216
      %v1221 = vadd.f32 %v1204, %v1218
      %1222 = vset.pattern.permute.xlu0 5
      %1223 = vperm.xlu0 %1222, %v1147
      %v1224 = vpop.permute.xlu0 %1223
      %v1226 = vmul.f32 %v1165, %v1224
      %v1227 = vmul.f32 %v1166, %v1224
      %v1228 = vadd.f32 %v1220, %v1226
      %v1229 = vadd.f32 %v1221, %v1227
      %1230 = vset.pattern.permute.xlu0 6
      %1231 = vperm.xlu0 %1230, %v1147
      %v1232 = vpop.permute.xlu0 %1231
      %v1234 = vmul.f32 %v1157, %v1232
      %v1235 = vmul.f32 %v1158, %v1232
      %1236 = vset.pattern.permute.xlu0 7
      %1237 = vperm.xlu0 %1236, %v1147
      %v1238 = vpop.permute.xlu0 %1237
      %v1240 = vunpack.c.l.s4 839922192
      %v1241 = vunpack.c.0.s8 %v1240
      %v1242 = vlaneseq
      %v1243 = vshrl.u32 %v1242, 7
      %v1244 = vsub.s32 %v1241, %v1243
      %v1245 = vrot.slane %v1238, %v1244
      %v1247 = vmul.f32 %v1146, %v1245
      %v1249 = vcombine.high %v1247, %v1247
      %v1251 = vadd.f32 %v1234, %v1247
      %v1252 = vadd.f32 %v1235, %v1249
      %1253 = vset.pattern.permute.xlu0 8
      %1254 = vperm.xlu0 %1253, %v1147
      %v1255 = vpop.permute.xlu0 %1254
      %v1257 = vmul.f32 %v1165, %v1255
      %v1258 = vmul.f32 %v1166, %v1255
      %v1259 = vadd.f32 %v1251, %v1257
      %v1260 = vadd.f32 %v1252, %v1258
      %1261 = vrot.lane.b32.xlu0 %v1197, 16
      %v1262 = vpop.permute.xlu0 %1261
      %1263 = vrot.lane.b32.xlu0 %v1198, 16
      %v1264 = vpop.permute.xlu0 %1263
      %v1265 = vsel %vm559, %v1262, %v1264
      %v1266 = vsel %vm559, %v1264, %v1262
      %v1267 = vmul.f32 %v566, %v1266
      %v1268 = vmul.f32 %v570, %v1265
      %v1269 = vadd.f32 %v1228, %v1267
      %v1270 = vadd.f32 %v1229, %v1268
      %1271 = vrot.lane.b32.xlu0 %v1259, 112
      %v1272 = vpop.permute.xlu0 %1271
      %1273 = vrot.lane.b32.xlu0 %v1260, 112
      %v1274 = vpop.permute.xlu0 %1273
      %v1275 = vsel %vm581, %v1272, %v1274
      %v1276 = vsel %vm581, %v1274, %v1272
      %v1277 = vmul.f32 %v588, %v1275
      %v1278 = vmul.f32 %v592, %v1276
      %v1279 = vadd.f32 %v1269, %v1277
      %v1280 = vadd.f32 %v1270, %v1278
      %v1281 = vmul.f32 %v1279, %v1279
      %v1282 = vmul.f32 %v1280, %v1280
      %v1283 = vmul.f32 %v1279, %v1281
      %v1284 = vmul.f32 %v1280, %v1282
      %v1285 = vmul.f32 %v1283, 0.044715
      %v1286 = vmul.f32 %v1284, 0.044715
      %v1287 = vadd.f32 %v1279, %v1285
      %v1288 = vadd.f32 %v1280, %v1286
      %v1289 = vmul.f32 %v1287, 0.7978846
      %v1290 = vmul.f32 %v1288, 0.7978846
      %v1291 = vtanh.pop %v1289
      %v1292 = vtanh.pop %v1290
      %v1293 = vadd.f32 %v1291, 1.0
      %v1294 = vadd.f32 %v1292, 1.0
      %v1295 = vmul.f32 %v1293, 0.5
      %v1296 = vmul.f32 %v1294, 0.5
      %v1297 = vmul.f32 %v1279, %v1295
      %v1298 = vmul.f32 %v1280, %v1296
      %v1299 = vld [vmem:[%s5] sm:$0x7]
      %1300 = vrot.lane.b32.xlu0 %v1142, 1
      %v1301 = vpop.permute.xlu0 %1300
      %1302 = vrot.lane.b32.xlu0 %v1144, 1
      %v1303 = vpop.permute.xlu0 %1302
      %v1304 = vsel %vm425, %v1301, %v1303
      %v1305 = vsel %vm425, %v1303, %v1301
      %v1306 = vmul.f32 %v1305, %v432
      %v1307 = vmul.f32 %v1304, %v436
      %1308 = vrot.lane.b32.xlu0 %v1142, 127
      %v1309 = vpop.permute.xlu0 %1308
      %1310 = vrot.lane.b32.xlu0 %v1144, 127
      %v1311 = vpop.permute.xlu0 %1310
      %v1312 = vsel %vm445, %v1309, %v1311
      %v1313 = vsel %vm445, %v1311, %v1309
      %v1314 = vmul.f32 %v1312, %v452
      %v1315 = vmul.f32 %v1313, %v456
      %1317 = vset.pattern.permute.xlu0 0
      %1318 = vperm.xlu0 %1317, %v1299
      %v1319 = vpop.permute.xlu0 %1318
      %v1321 = vmul.f32 %v1306, %v1319
      %v1322 = vmul.f32 %v1307, %v1319
      %1323 = vset.pattern.permute.xlu0 1
      %1324 = vperm.xlu0 %1323, %v1299
      %v1325 = vpop.permute.xlu0 %1324
      %v1327 = vmul.f32 %v1142, %v1325
      %v1328 = vmul.f32 %v1144, %v1325
      %v1329 = vadd.f32 %v1321, %v1327
      %v1330 = vadd.f32 %v1322, %v1328
      %1331 = vset.pattern.permute.xlu0 2
      %1332 = vperm.xlu0 %1331, %v1299
      %v1333 = vpop.permute.xlu0 %1332
      %v1335 = vmul.f32 %v1314, %v1333
      %v1336 = vmul.f32 %v1315, %v1333
      %v1337 = vadd.f32 %v1329, %v1335
      %v1338 = vadd.f32 %v1330, %v1336
      %1339 = vset.pattern.permute.xlu0 3
      %1340 = vperm.xlu0 %1339, %v1299
      %v1341 = vpop.permute.xlu0 %1340
      %v1343 = vmul.f32 %v1306, %v1341
      %v1344 = vmul.f32 %v1307, %v1341
      %1345 = vset.pattern.permute.xlu0 4
      %1346 = vperm.xlu0 %1345, %v1299
      %v1347 = vpop.permute.xlu0 %1346
      %v1349 = vmul.f32 %v1142, %v1347
      %v1350 = vmul.f32 %v1144, %v1347
      %v1351 = vadd.f32 %v1343, %v1349
      %v1352 = vadd.f32 %v1344, %v1350
      %1353 = vset.pattern.permute.xlu0 5
      %1354 = vperm.xlu0 %1353, %v1299
      %v1355 = vpop.permute.xlu0 %1354
      %v1357 = vmul.f32 %v1314, %v1355
      %v1358 = vmul.f32 %v1315, %v1355
      %v1359 = vadd.f32 %v1351, %v1357
      %v1360 = vadd.f32 %v1352, %v1358
      %1361 = vset.pattern.permute.xlu0 6
      %1362 = vperm.xlu0 %1361, %v1299
      %v1363 = vpop.permute.xlu0 %1362
      %v1365 = vmul.f32 %v1306, %v1363
      %v1366 = vmul.f32 %v1307, %v1363
      %1367 = vset.pattern.permute.xlu0 7
      %1368 = vperm.xlu0 %1367, %v1299
      %v1369 = vpop.permute.xlu0 %1368
      %v1371 = vmul.f32 %v1142, %v1369
      %v1372 = vmul.f32 %v1144, %v1369
      %v1373 = vadd.f32 %v1365, %v1371
      %v1374 = vadd.f32 %v1366, %v1372
      %1375 = vset.pattern.permute.xlu0 8
      %1376 = vperm.xlu0 %1375, %v1299
      %v1377 = vpop.permute.xlu0 %1376
      %v1379 = vmul.f32 %v1314, %v1377
      %v1380 = vmul.f32 %v1315, %v1377
      %v1381 = vadd.f32 %v1373, %v1379
      %v1382 = vadd.f32 %v1374, %v1380
      %1383 = vrot.lane.b32.xlu0 %v1337, 16
      %v1384 = vpop.permute.xlu0 %1383
      %1385 = vrot.lane.b32.xlu0 %v1338, 16
      %v1386 = vpop.permute.xlu0 %1385
      %v1387 = vsel %vm559, %v1384, %v1386
      %v1388 = vsel %vm559, %v1386, %v1384
      %v1389 = vmul.f32 %v566, %v1388
      %v1390 = vmul.f32 %v570, %v1387
      %v1391 = vadd.f32 %v1359, %v1389
      %v1392 = vadd.f32 %v1360, %v1390
      %1393 = vrot.lane.b32.xlu0 %v1381, 112
      %v1394 = vpop.permute.xlu0 %1393
      %1395 = vrot.lane.b32.xlu0 %v1382, 112
      %v1396 = vpop.permute.xlu0 %1395
      %v1397 = vsel %vm581, %v1394, %v1396
      %v1398 = vsel %vm581, %v1396, %v1394
      %v1399 = vmul.f32 %v588, %v1397
      %v1400 = vmul.f32 %v592, %v1398
      %v1401 = vadd.f32 %v1391, %v1399
      %v1402 = vadd.f32 %v1392, %v1400
      %v1403 = vmul.f32 %v1401, %v1401
      %v1404 = vmul.f32 %v1402, %v1402
      %v1405 = vmul.f32 %v1401, %v1403
      %v1406 = vmul.f32 %v1402, %v1404
      %v1407 = vmul.f32 %v1405, 0.044715
      %v1408 = vmul.f32 %v1406, 0.044715
      %v1409 = vadd.f32 %v1401, %v1407
      %v1410 = vadd.f32 %v1402, %v1408
      %v1411 = vmul.f32 %v1409, 0.7978846
      %v1412 = vmul.f32 %v1410, 0.7978846
      %v1413 = vtanh.pop %v1411
      %v1414 = vtanh.pop %v1412
      %v1415 = vadd.f32 %v1413, 1.0
      %v1416 = vadd.f32 %v1414, 1.0
      %v1417 = vmul.f32 %v1415, 0.5
      %v1418 = vmul.f32 %v1416, 0.5
      %v1419 = vmul.f32 %v1401, %v1417
      %v1420 = vmul.f32 %v1402, %v1418
      %v1421 = vld [vmem:[%s6] sm:$0x3f]
      %v1422 = vld [vmem:[%s7] sm:$0x3f]
      %v1424 = vsel %vm618, %v1422, 0
      %v1427 = vsel %vm622, %v1419, 0
      %v1430 = vsel %vm622, %v1420, 0
      %1432 = vmatprep.subr.mxu0 %v1430
      %1433 = vmatpush1.msra.mxu0 %v1427
      %1434 = vmatprep.subr.mxu0 0.0
      %1435 = vmatpush1.msra.mxu0 0.0
      %1436 = vmatprep.subr.mxu0 0.0
      %1437 = vmatpush1.msra.mxu0 0.0
      %1438 = vmatprep.subr.mxu0 0.0
      %1439 = vmatpush1.msra.mxu0 0.0
      %1440 = vmatprep.subr.mxu0 0.0
      %1441 = vmatpush1.msra.mxu0 0.0
      %1442 = vmatprep.subr.mxu0 0.0
      %1443 = vmatpush1.msra.mxu0 0.0
      %1444 = vmatprep.subr.mxu0 0.0
      %1445 = vmatpush1.msra.mxu0 0.0
      %1446 = vmatprep.subr.mxu0 0.0
      %1447 = vmatpush1.msra.mxu0 0.0
      %1448 = vmatprep.subr.mxu0 0.0
      %1449 = vmatpush1.msra.mxu0 0.0
      %1450 = vmatprep.subr.mxu0 0.0
      %1451 = vmatpush1.msra.mxu0 0.0
      %1452 = vmatprep.subr.mxu0 0.0
      %1453 = vmatpush1.msra.mxu0 0.0
      %1454 = vmatprep.subr.mxu0 0.0
      %1455 = vmatpush1.msra.mxu0 0.0
      %1456 = vmatprep.subr.mxu0 0.0
      %1457 = vmatpush1.msra.mxu0 0.0
      %1458 = vmatprep.subr.mxu0 0.0
      %1459 = vmatpush1.msra.mxu0 0.0
      %1460 = vmatprep.subr.mxu0 0.0
      %1461 = vmatpush1.msra.mxu0 0.0
      %1462 = vmatprep.subr.mxu0 0.0
      %1463 = vmatpush1.msra.mxu0 0.0
      %1464 = vmatprep.subr.mxu0 0.0
      %1465 = vmatpush1.msra.mxu0 0.0
      %1466 = vmatprep.subr.mxu0 0.0
      %1467 = vmatpush1.msra.mxu0 0.0
      %1468 = vmatprep.subr.mxu0 0.0
      %1469 = vmatpush1.msra.mxu0 0.0
      %1470 = vmatprep.subr.mxu0 0.0
      %1471 = vmatpush1.msra.mxu0 0.0
      %1472 = vmatprep.subr.mxu0 0.0
      %1473 = vmatpush1.msra.mxu0 0.0
      %1474 = vmatprep.subr.mxu0 0.0
      %1475 = vmatpush1.msra.mxu0 0.0
      %1476 = vmatprep.subr.mxu0 0.0
      %1477 = vmatpush1.msra.mxu0 0.0
      %1478 = vmatprep.subr.mxu0 0.0
      %1479 = vmatpush1.msra.mxu0 0.0
      %1480 = vmatprep.subr.mxu0 0.0
      %1481 = vmatpush1.msra.mxu0 0.0
      %1482 = vmatprep.subr.mxu0 0.0
      %1483 = vmatpush1.msra.mxu0 0.0
      %1484 = vmatprep.subr.mxu0 0.0
      %1485 = vmatpush1.msra.mxu0 0.0
      %1486 = vmatprep.subr.mxu0 0.0
      %1487 = vmatpush1.msra.mxu0 0.0
      %1488 = vmatprep.subr.mxu0 0.0
      %1489 = vmatpush1.msra.mxu0 0.0
      %1490 = vmatprep.subr.mxu0 0.0
      %1491 = vmatpush1.msra.mxu0 0.0
      %1492 = vmatprep.subr.mxu0 0.0
      %1493 = vmatpush1.msra.mxu0 0.0
      %1494 = vmatprep.subr.mxu0 0.0
      %1495 = vmatpush1.msra.mxu0 0.0
      %1496 = vmatprep.mubr.f32.mxu0 0.0
      %1497 = vmatmul.mubr.f32.gmra.mrb[0].mxu0 %v1424
      %v1498 = vpop.f32.mrb[0].mxu0
      %v1499 = vadd.f32 0.0, %v1498
      %v1500 = vpop.f32.mrb[0].mxu0
      %v1501 = vadd.f32 0.0, %v1500
      %1502 = vdwg.mxu0
      %v1504 = vsel %vm618, %v1421, 0
      %v1507 = vsel %vm622, %v1297, 0
      %v1510 = vsel %vm622, %v1298, 0
      %1512 = vmatprep.subr.mxu0 %v1510
      %1513 = vmatpush1.msra.mxu0 %v1507
      %1514 = vmatprep.subr.mxu0 0.0
      %1515 = vmatpush1.msra.mxu0 0.0
      %1516 = vmatprep.subr.mxu0 0.0
      %1517 = vmatpush1.msra.mxu0 0.0
      %1518 = vmatprep.subr.mxu0 0.0
      %1519 = vmatpush1.msra.mxu0 0.0
      %1520 = vmatprep.subr.mxu0 0.0
      %1521 = vmatpush1.msra.mxu0 0.0
      %1522 = vmatprep.subr.mxu0 0.0
      %1523 = vmatpush1.msra.mxu0 0.0
      %1524 = vmatprep.subr.mxu0 0.0
      %1525 = vmatpush1.msra.mxu0 0.0
      %1526 = vmatprep.subr.mxu0 0.0
      %1527 = vmatpush1.msra.mxu0 0.0
      %1528 = vmatprep.subr.mxu0 0.0
      %1529 = vmatpush1.msra.mxu0 0.0
      %1530 = vmatprep.subr.mxu0 0.0
      %1531 = vmatpush1.msra.mxu0 0.0
      %1532 = vmatprep.subr.mxu0 0.0
      %1533 = vmatpush1.msra.mxu0 0.0
      %1534 = vmatprep.subr.mxu0 0.0
      %1535 = vmatpush1.msra.mxu0 0.0
      %1536 = vmatprep.subr.mxu0 0.0
      %1537 = vmatpush1.msra.mxu0 0.0
      %1538 = vmatprep.subr.mxu0 0.0
      %1539 = vmatpush1.msra.mxu0 0.0
      %1540 = vmatprep.subr.mxu0 0.0
      %1541 = vmatpush1.msra.mxu0 0.0
      %1542 = vmatprep.subr.mxu0 0.0
      %1543 = vmatpush1.msra.mxu0 0.0
      %1544 = vmatprep.subr.mxu0 0.0
      %1545 = vmatpush1.msra.mxu0 0.0
      %1546 = vmatprep.subr.mxu0 0.0
      %1547 = vmatpush1.msra.mxu0 0.0
      %1548 = vmatprep.subr.mxu0 0.0
      %1549 = vmatpush1.msra.mxu0 0.0
      %1550 = vmatprep.subr.mxu0 0.0
      %1551 = vmatpush1.msra.mxu0 0.0
      %1552 = vmatprep.subr.mxu0 0.0
      %1553 = vmatpush1.msra.mxu0 0.0
      %1554 = vmatprep.subr.mxu0 0.0
      %1555 = vmatpush1.msra.mxu0 0.0
      %1556 = vmatprep.subr.mxu0 0.0
      %1557 = vmatpush1.msra.mxu0 0.0
      %1558 = vmatprep.subr.mxu0 0.0
      %1559 = vmatpush1.msra.mxu0 0.0
      %1560 = vmatprep.subr.mxu0 0.0
      %1561 = vmatpush1.msra.mxu0 0.0
      %1562 = vmatprep.subr.mxu0 0.0
      %1563 = vmatpush1.msra.mxu0 0.0
      %1564 = vmatprep.subr.mxu0 0.0
      %1565 = vmatpush1.msra.mxu0 0.0
      %1566 = vmatprep.subr.mxu0 0.0
      %1567 = vmatpush1.msra.mxu0 0.0
      %1568 = vmatprep.subr.mxu0 0.0
      %1569 = vmatpush1.msra.mxu0 0.0
      %1570 = vmatprep.subr.mxu0 0.0
      %1571 = vmatpush1.msra.mxu0 0.0
      %1572 = vmatprep.subr.mxu0 0.0
      %1573 = vmatpush1.msra.mxu0 0.0
      %1574 = vmatprep.subr.mxu0 0.0
      %1575 = vmatpush1.msra.mxu0 0.0
      %1576 = vmatprep.mubr.f32.mxu0 0.0
      %1577 = vmatmul.mubr.f32.gmra.mrb[0].mxu0 %v1504
      %v1578 = vpop.f32.mrb[0].mxu0
      %v1579 = vadd.f32 %v1499, %v1578
      %v1580 = vpop.f32.mrb[0].mxu0
      %v1581 = vadd.f32 %v1501, %v1580
      %1582 = vdwg.mxu0
      %v1583 = vmul.f32 %v1579, %v1579
      %v1584 = vmul.f32 %v1581, %v1581
      %v1585 = vmul.f32 %v1579, %v1583
      %v1586 = vmul.f32 %v1581, %v1584
      %v1587 = vmul.f32 %v1585, 0.044715
      %v1588 = vmul.f32 %v1586, 0.044715
      %v1589 = vadd.f32 %v1579, %v1587
      %v1590 = vadd.f32 %v1581, %v1588
      %v1591 = vmul.f32 %v1589, 0.7978846
      %v1592 = vmul.f32 %v1590, 0.7978846
      %v1593 = vtanh.pop %v1591
      %v1594 = vtanh.pop %v1592
      %v1595 = vadd.f32 %v1593, 1.0
      %v1596 = vadd.f32 %v1594, 1.0
      %v1597 = vmul.f32 %v1595, 0.5
      %v1598 = vmul.f32 %v1596, 0.5
      %v1599 = vmul.f32 %v1579, %v1597
      %v1600 = vmul.f32 %v1581, %v1598
      %v1601 = vld [vmem:[%s8] sm:$0x3f]
      %1602 = vrot.lane.b32.xlu0 %v1599, 1
      %v1603 = vpop.permute.xlu0 %1602
      %1604 = vrot.lane.b32.xlu0 %v1600, 1
      %v1605 = vpop.permute.xlu0 %1604
      %v1606 = vsel %vm425, %v1603, %v1605
      %v1607 = vsel %vm425, %v1605, %v1603
      %v1608 = vmul.f32 %v1607, %v432
      %v1609 = vmul.f32 %v1606, %v436
      %1610 = vrot.lane.b32.xlu0 %v1599, 127
      %v1611 = vpop.permute.xlu0 %1610
      %1612 = vrot.lane.b32.xlu0 %v1600, 127
      %v1613 = vpop.permute.xlu0 %1612
      %v1614 = vsel %vm445, %v1611, %v1613
      %v1615 = vsel %vm445, %v1613, %v1611
      %v1616 = vmul.f32 %v1614, %v452
      %v1617 = vmul.f32 %v1615, %v456
      %1619 = vset.pattern.permute.xlu0 0
      %1620 = vperm.xlu0 %1619, %v1601
      %v1621 = vpop.permute.xlu0 %1620
      %v1623 = vmul.f32 %v1608, %v1621
      %v1624 = vmul.f32 %v1609, %v1621
      %1625 = vset.pattern.permute.xlu0 1
      %1626 = vperm.xlu0 %1625, %v1601
      %v1627 = vpop.permute.xlu0 %1626
      %v1629 = vmul.f32 %v1599, %v1627
      %v1630 = vmul.f32 %v1600, %v1627
      %v1631 = vadd.f32 %v1623, %v1629
      %v1632 = vadd.f32 %v1624, %v1630
      %1633 = vset.pattern.permute.xlu0 2
      %1634 = vperm.xlu0 %1633, %v1601
      %v1635 = vpop.permute.xlu0 %1634
      %v1637 = vmul.f32 %v1616, %v1635
      %v1638 = vmul.f32 %v1617, %v1635
      %v1639 = vadd.f32 %v1631, %v1637
      %v1640 = vadd.f32 %v1632, %v1638
      %1641 = vset.pattern.permute.xlu0 3
      %1642 = vperm.xlu0 %1641, %v1601
      %v1643 = vpop.permute.xlu0 %1642
      %v1645 = vmul.f32 %v1608, %v1643
      %v1646 = vmul.f32 %v1609, %v1643
      %1647 = vset.pattern.permute.xlu0 4
      %1648 = vperm.xlu0 %1647, %v1601
      %v1649 = vpop.permute.xlu0 %1648
      %v1651 = vmul.f32 %v1599, %v1649
      %v1652 = vmul.f32 %v1600, %v1649
      %v1653 = vadd.f32 %v1645, %v1651
      %v1654 = vadd.f32 %v1646, %v1652
      %1655 = vset.pattern.permute.xlu0 5
      %1656 = vperm.xlu0 %1655, %v1601
      %v1657 = vpop.permute.xlu0 %1656
      %v1659 = vmul.f32 %v1616, %v1657
      %v1660 = vmul.f32 %v1617, %v1657
      %v1661 = vadd.f32 %v1653, %v1659
      %v1662 = vadd.f32 %v1654, %v1660
      %1663 = vset.pattern.permute.xlu0 6
      %1664 = vperm.xlu0 %1663, %v1601
      %v1665 = vpop.permute.xlu0 %1664
      %v1667 = vmul.f32 %v1608, %v1665
      %v1668 = vmul.f32 %v1609, %v1665
      %1669 = vset.pattern.permute.xlu0 7
      %1670 = vperm.xlu0 %1669, %v1601
      %v1671 = vpop.permute.xlu0 %1670
      %v1673 = vmul.f32 %v1599, %v1671
      %v1674 = vmul.f32 %v1600, %v1671
      %v1675 = vadd.f32 %v1667, %v1673
      %v1676 = vadd.f32 %v1668, %v1674
      %1677 = vset.pattern.permute.xlu0 8
      %1678 = vperm.xlu0 %1677, %v1601
      %v1679 = vpop.permute.xlu0 %1678
      %v1681 = vmul.f32 %v1616, %v1679
      %v1682 = vmul.f32 %v1617, %v1679
      %v1683 = vadd.f32 %v1675, %v1681
      %v1684 = vadd.f32 %v1676, %v1682
      %1685 = vrot.lane.b32.xlu0 %v1639, 16
      %v1686 = vpop.permute.xlu0 %1685
      %1687 = vrot.lane.b32.xlu0 %v1640, 16
      %v1688 = vpop.permute.xlu0 %1687
      %v1689 = vsel %vm559, %v1686, %v1688
      %v1690 = vsel %vm559, %v1688, %v1686
      %v1691 = vmul.f32 %v566, %v1690
      %v1692 = vmul.f32 %v570, %v1689
      %v1693 = vadd.f32 %v1661, %v1691
      %v1694 = vadd.f32 %v1662, %v1692
      %1695 = vrot.lane.b32.xlu0 %v1683, 112
      %v1696 = vpop.permute.xlu0 %1695
      %1697 = vrot.lane.b32.xlu0 %v1684, 112
      %v1698 = vpop.permute.xlu0 %1697
      %v1699 = vsel %vm581, %v1696, %v1698
      %v1700 = vsel %vm581, %v1698, %v1696
      %v1701 = vmul.f32 %v588, %v1699
      %v1702 = vmul.f32 %v592, %v1700
      %v1703 = vadd.f32 %v1693, %v1701
      %v1704 = vadd.f32 %v1694, %v1702
      %v1705 = vmul.f32 %v1703, %v1703
      %v1706 = vmul.f32 %v1704, %v1704
      %v1707 = vmul.f32 %v1703, %v1705
      %v1708 = vmul.f32 %v1704, %v1706
      %v1709 = vmul.f32 %v1707, 0.044715
      %v1710 = vmul.f32 %v1708, 0.044715
      %v1711 = vadd.f32 %v1703, %v1709
      %v1712 = vadd.f32 %v1704, %v1710
      %v1713 = vmul.f32 %v1711, 0.7978846
      %v1714 = vmul.f32 %v1712, 0.7978846
      %v1715 = vtanh.pop %v1713
      %v1716 = vtanh.pop %v1714
      %v1717 = vadd.f32 %v1715, 1.0
      %v1718 = vadd.f32 %v1716, 1.0
      %v1719 = vmul.f32 %v1717, 0.5
      %v1720 = vmul.f32 %v1718, 0.5
      %v1721 = vmul.f32 %v1703, %v1719
      %v1722 = vmul.f32 %v1704, %v1720
      %v1723 = vld [vmem:[%s9] sm:$0x3f]
      %vm1724 = vcmask 48128
      %v1726 = vsel %vm1724, %v1723, 0
      %vm1728 = vcmask 1045504
      %v1730 = vsel %vm1728, %v1721, 0
      %v1733 = vsel %vm1728, %v1722, 0
      %1735 = vmatprep.subr.mxu0 %v1733
      %1736 = vmatpush1.msra.mxu0 %v1730
      %1737 = vmatprep.subr.mxu0 0.0
      %1738 = vmatpush1.msra.mxu0 0.0
      %1739 = vmatprep.subr.mxu0 0.0
      %1740 = vmatpush1.msra.mxu0 0.0
      %1741 = vmatprep.subr.mxu0 0.0
      %1742 = vmatpush1.msra.mxu0 0.0
      %1743 = vmatprep.subr.mxu0 0.0
      %1744 = vmatpush1.msra.mxu0 0.0
      %1745 = vmatprep.subr.mxu0 0.0
      %1746 = vmatpush1.msra.mxu0 0.0
      %1747 = vmatprep.subr.mxu0 0.0
      %1748 = vmatpush1.msra.mxu0 0.0
      %1749 = vmatprep.subr.mxu0 0.0
      %1750 = vmatpush1.msra.mxu0 0.0
      %1751 = vmatprep.subr.mxu0 0.0
      %1752 = vmatpush1.msra.mxu0 0.0
      %1753 = vmatprep.subr.mxu0 0.0
      %1754 = vmatpush1.msra.mxu0 0.0
      %1755 = vmatprep.subr.mxu0 0.0
      %1756 = vmatpush1.msra.mxu0 0.0
      %1757 = vmatprep.subr.mxu0 0.0
      %1758 = vmatpush1.msra.mxu0 0.0
      %1759 = vmatprep.subr.mxu0 0.0
      %1760 = vmatpush1.msra.mxu0 0.0
      %1761 = vmatprep.subr.mxu0 0.0
      %1762 = vmatpush1.msra.mxu0 0.0
      %1763 = vmatprep.subr.mxu0 0.0
      %1764 = vmatpush1.msra.mxu0 0.0
      %1765 = vmatprep.subr.mxu0 0.0
      %1766 = vmatpush1.msra.mxu0 0.0
      %1767 = vmatprep.subr.mxu0 0.0
      %1768 = vmatpush1.msra.mxu0 0.0
      %1769 = vmatprep.subr.mxu0 0.0
      %1770 = vmatpush1.msra.mxu0 0.0
      %1771 = vmatprep.subr.mxu0 0.0
      %1772 = vmatpush1.msra.mxu0 0.0
      %1773 = vmatprep.subr.mxu0 0.0
      %1774 = vmatpush1.msra.mxu0 0.0
      %1775 = vmatprep.subr.mxu0 0.0
      %1776 = vmatpush1.msra.mxu0 0.0
      %1777 = vmatprep.subr.mxu0 0.0
      %1778 = vmatpush1.msra.mxu0 0.0
      %1779 = vmatprep.subr.mxu0 0.0
      %1780 = vmatpush1.msra.mxu0 0.0
      %1781 = vmatprep.subr.mxu0 0.0
      %1782 = vmatpush1.msra.mxu0 0.0
      %1783 = vmatprep.subr.mxu0 0.0
      %1784 = vmatpush1.msra.mxu0 0.0
      %1785 = vmatprep.subr.mxu0 0.0
      %1786 = vmatpush1.msra.mxu0 0.0
      %1787 = vmatprep.subr.mxu0 0.0
      %1788 = vmatpush1.msra.mxu0 0.0
      %1789 = vmatprep.subr.mxu0 0.0
      %1790 = vmatpush1.msra.mxu0 0.0
      %1791 = vmatprep.subr.mxu0 0.0
      %1792 = vmatpush1.msra.mxu0 0.0
      %1793 = vmatprep.subr.mxu0 0.0
      %1794 = vmatpush1.msra.mxu0 0.0
      %1795 = vmatprep.subr.mxu0 0.0
      %1796 = vmatpush1.msra.mxu0 0.0
      %1797 = vmatprep.subr.mxu0 0.0
      %1798 = vmatpush1.msra.mxu0 0.0
      %1799 = vmatprep.mubr.f32.mxu0 0.0
      %1800 = vmatmul.mubr.f32.gmra.mrb[0].mxu0 %v1726
      %v1801 = vpop.f32.mrb[0].mxu0
      %v1802 = vadd.f32 0.0, %v1801
      %v1803 = vpop.f32.mrb[0].mxu0
      %v1804 = vadd.f32 0.0, %v1803
      %1805 = vdwg.mxu0
      %v1806 = vmul.f32 %v1802, %v1802
      %v1807 = vmul.f32 %v1804, %v1804
      %v1808 = vmul.f32 %v1802, %v1806
      %v1809 = vmul.f32 %v1804, %v1807
      %v1810 = vmul.f32 %v1808, 0.044715
      %v1811 = vmul.f32 %v1809, 0.044715
      %v1812 = vadd.f32 %v1802, %v1810
      %v1813 = vadd.f32 %v1804, %v1811
      %v1814 = vmul.f32 %v1812, 0.7978846
      %v1815 = vmul.f32 %v1813, 0.7978846
      %v1816 = vtanh.pop %v1814
      %v1817 = vtanh.pop %v1815
      %v1818 = vadd.f32 %v1816, 1.0
      %v1819 = vadd.f32 %v1817, 1.0
      %v1820 = vmul.f32 %v1818, 0.5
      %v1821 = vmul.f32 %v1819, 0.5
      %v1822 = vmul.f32 %v1802, %v1820
      %v1823 = vmul.f32 %v1804, %v1821
      %1824 = vst [vmem:[%s406] sm:$0x3f] %v1822
      %1825 = vst [vmem:[%s406 + $0x8] sm:$0x3f] %v1823
      %p1826 = scmp.lt.s32.totalorder %s22, 1
      %s1827 = scalar_select %p1826, %s22, 1
      %s1828 = smul.addr %s1827, 2
      %s1829 = smul.addr %s1828, 8
      %s1830 = scalar_lea.vmem %s11, %s1829
      // Predicated region
      $region65: #{tpu_custom_call.1} parent=63 // pred_check
        %p1831 = pneg %p281
      $region66: #{tpu_custom_call.1} parent=63 // pred_check_branch
        %1833 = sbr.rel (%p1831) target = $region68
      $region67: #{tpu_custom_call.1} parent=63 // pred_region
        _
      $region68: #{tpu_custom_call.1} parent=63 // pred_fallthru
        _
    $region64: #{tpu_custom_call.1} parent=5 // pred_fallthru
      _
    %p1834 = scmp.le.s32.totalorder 2, %s17
    // Predicated region
    $region69: #{tpu_custom_call.1} parent=5 // pred_check
      %p1835 = pneg %p1834
    $region70: #{tpu_custom_call.1} parent=5 // pred_check_branch
      %1837 = sbr.rel (%p1835) target = $region72
    $region71: #{tpu_custom_call.1} parent=5 // pred_region
      %s1838 = ssub.s32 %s17, 2
      // Predicated region
      $region73: #{tpu_custom_call.1} parent=71 // pred_check
        %p1839 = pneg %p287
      $region74: #{tpu_custom_call.1} parent=71 // pred_check_branch
        %1841 = sbr.rel (%p1839) target = $region76
      $region75: #{tpu_custom_call.1} parent=71 // pred_region
        %p1842 = scmp.lt.s32.totalorder %s23, 1
        %s1843 = scalar_select %p1842, %s23, 1
        %s1844 = smul.addr %s1843, 2
        %s1845 = smul.addr %s1844, 8
        %s1846 = scalar_lea.vmem %s11, %s1845
      $region76: #{tpu_custom_call.1} parent=71 // pred_fallthru
        _
    $region72: #{tpu_custom_call.1} parent=5 // pred_fallthru
      _
  $region6: #{tpu_custom_call.1} parent=0 // loop_footer
    %s21 = sadd.s32 1, %s17
  $region7: #{tpu_custom_call.1} parent=0 // loop_footer_branch
    %16 = sbr.rel target = $region3
  $region8: #{tpu_custom_call.1} parent=0 // loop_exit
    _

</llo_original>
